<compile_context>
chip_gen: v5e
topology: v5e:2x2
jax: 0.10.0
libtpu: 0.0.40
codegen_flags: <defaults>
</compile_context>

<pallas_src>
import functools

import jax
import jax.numpy as jnp
from jax.experimental import pallas as pl
from jax.experimental.pallas import tpu as pltpu


# ----------------------------------------------------------------------------
# Fused kernel: [SR-conv + LN + KV proj (once per batch)] + attention + proj
# grid = (batch, query_tile); K/V scratch persists across query tiles.
# ----------------------------------------------------------------------------
def _fused_attn_kernel(xq_ref, kvsrc_ref, wsr_ref, bsr_ref, g_ref, beta_ref,
                       wq_ref, bq_ref, wkv_ref, bkv_ref, wp_ref, bp_ref,
                       o_ref, kv_s,
                       *, num_heads, scale, has_sr, mxu_dtype):
    t = pl.program_id(1)

    # --- once per batch (first query tile): build x_kv, project K|V ---------
    @pl.when(t == 0)
    def _compute_kv():
        if has_sr:
            p = kvsrc_ref[0].astype(mxu_dtype)                    # (Nk, R*R*C)
            y = jnp.dot(p, wsr_ref[...],
                        preferred_element_type=jnp.float32) + bsr_ref[...]
            mu = jnp.mean(y, axis=-1, keepdims=True)
            var = jnp.mean(jnp.square(y - mu), axis=-1, keepdims=True)
            xkv = (y - mu) * jax.lax.rsqrt(var + 1e-5) * g_ref[...] + beta_ref[...]
        else:
            xkv = kvsrc_ref[0].astype(jnp.float32)                # (Nk, C)
        # single fused K|V projection: (Nk, C) @ (C, 2C)
        kv_s[...] = (jnp.dot(xkv.astype(mxu_dtype), wkv_ref[...],
                             preferred_element_type=jnp.float32) + bkv_ref[...])

    # --- every query tile ----------------------------------------------------
    xq = xq_ref[0].astype(mxu_dtype)                              # (TQ, C)
    # full-C Q projection; fold the attention scale into q (cheap: TQ*C mults)
    q = (jnp.dot(xq, wq_ref[...], preferred_element_type=jnp.float32)
         + bq_ref[...]) * scale                                    # (TQ, C) f32

    C = q.shape[-1]
    d = C // num_heads
    kv_all = kv_s[...]                                             # (Nk, 2C) f32

    heads = []
    for m in range(num_heads):                 # static unroll, static lane slices
        lo = m * d
        qh = q[:, lo:lo + d].astype(mxu_dtype)                     # (TQ, d)
        kh = kv_all[:, lo:lo + d].astype(mxu_dtype)                # (Nk, d)
        vh = kv_all[:, C + lo:C + lo + d].astype(mxu_dtype)        # (Nk, d)
        # contract last dims: K consumed untransposed by the MXU
        s = jax.lax.dot_general(qh, kh, (((1,), (1,)), ((), ())),
                                preferred_element_type=jnp.float32)  # (TQ, Nk)
        s = s - jnp.max(s, axis=-1, keepdims=True)
        e = jnp.exp(s)                                             # f32 (EUP)
        o_un = jnp.dot(e.astype(mxu_dtype), vh,
                       preferred_element_type=jnp.float32)         # (TQ, d)
        inv = pl.reciprocal(jnp.sum(e, axis=-1, keepdims=True), approx=True)
        heads.append(o_un * inv)

    o = jnp.concatenate(heads, axis=-1).astype(mxu_dtype)          # (TQ, C)
    o_ref[0] = (jnp.dot(o, wp_ref[...], preferred_element_type=jnp.float32)
                + bp_ref[...]).astype(o_ref.dtype)


def _pick_q_tile(n, target=512):
    """Largest divisor of n that is <= target and a multiple of 8 (else n)."""
    if n <= target:
        return n
    for cand in range(min(target, n), 7, -1):
        if n % cand == 0 and cand % 8 == 0:
            return cand
    return n


# ----------------------------------------------------------------------------
# Full forward (wrapper glue = reshapes only; all matmuls / softmax / LN fused)
# ----------------------------------------------------------------------------
def efficient_self_attention_forward(x, h, w, params, num_heads, sr_ratio,
                                     dropout_p=0.0, mxu_dtype=None, q_tile=512):
    B, N, C = x.shape
    assert N == h * w and C % num_heads == 0
    d = C // num_heads
    scale = float(d) ** -0.5
    dt = x.dtype if mxu_dtype is None else jnp.dtype(mxu_dtype)

    if sr_ratio > 1:
        R = sr_ratio
        hk, wk_ = h // R, w // R
        # TODO(synk): patch extraction stays in the wrapper (one XLA transpose);
        # an in-kernel strided gather would save one HBM copy of x.
        xi = x.reshape(B, hk, R, wk_, R, C).transpose(0, 1, 3, 2, 4, 5)
        kv_src = xi.reshape(B, hk * wk_, R * R * C)
        w_sr = params["w_sr"].astype(dt)                 # (R*R*C, C), (kh,kw,ci)-major
        b_sr = params["b_sr"].reshape(1, C).astype(jnp.float32)
        gam = params["ln_gamma"].reshape(1, C).astype(jnp.float32)
        bet = params["ln_beta"].reshape(1, C).astype(jnp.float32)
    else:
        kv_src = x
        w_sr = jnp.zeros((C, C), dt)                     # unused dummies
        b_sr = jnp.zeros((1, C), jnp.float32)
        gam = jnp.ones((1, C), jnp.float32)
        bet = jnp.zeros((1, C), jnp.float32)

    Nk, K_sr = kv_src.shape[1], w_sr.shape[0]
    tq = _pick_q_tile(N, q_tile)
    T = N // tq

    wq = params["wq"].astype(dt)
    wkv = params["wkv"].astype(dt)                       # (C, 2C): [Wk | Wv]
    wp = params["wp"].astype(dt)
    bq = params["bq"].reshape(1, C).astype(jnp.float32)
    bkv = params["bkv"].reshape(1, 2 * C).astype(jnp.float32)
    bp = params["bp"].reshape(1, C).astype(jnp.float32)

    kernel = functools.partial(_fused_attn_kernel, num_heads=num_heads,
                               scale=scale, has_sr=(sr_ratio > 1),
                               mxu_dtype=dt)

    const = lambda b, t: (0, 0)
    # TODO(synk): lane-dense output fold (last dim >= 128 when C < 128) not
    # applied; would require an in-kernel (TQ,C)->(TQ/f,f*C) relayout.
    out = pl.pallas_call(
        kernel,
        out_shape=jax.ShapeDtypeStruct((B, N, C), x.dtype),
        grid=(B, T),
        in_specs=[
            pl.BlockSpec((1, tq, C), lambda b, t: (b, t, 0)),     # query tile
            pl.BlockSpec((1, Nk, kv_src.shape[2]),
                         lambda b, t: (b, 0, 0)),                 # kv source (per batch)
            pl.BlockSpec((K_sr, C), const),                       # w_sr (resident)
            pl.BlockSpec((1, C), const),                          # b_sr
            pl.BlockSpec((1, C), const),                          # ln gamma
            pl.BlockSpec((1, C), const),                          # ln beta
            pl.BlockSpec((C, C), const),                          # wq
            pl.BlockSpec((1, C), const),                          # bq
            pl.BlockSpec((C, 2 * C), const),                      # wkv
            pl.BlockSpec((1, 2 * C), const),                      # bkv
            pl.BlockSpec((C, C), const),                          # wp
            pl.BlockSpec((1, C), const),                          # bp
        ],
        out_specs=pl.BlockSpec((1, tq, C), lambda b, t: (b, t, 0)),
        scratch_shapes=[pltpu.VMEM((Nk, 2 * C), jnp.float32)],    # K|V scratch
        compiler_params=pltpu.CompilerParams(
            dimension_semantics=("parallel", "arbitrary"),
            vmem_limit_bytes=64 * 1024 * 1024),
    )(x, kv_src, w_sr, b_sr, gam, bet, wq, bq, wkv, bkv, wp, bp)

    # TODO(synk): F.dropout omitted — inference semantics (dropout_p treated as 0).
    return out


# ----------------------------------------------------------------------------
# Pure-JAX reference for verification
# ----------------------------------------------------------------------------
def reference(x, h, w, params, num_heads, sr_ratio):
    B, N, C = x.shape
    d = C // num_heads
    scale = float(d) ** -0.5
    q = x @ params["wq"] + params["bq"]
    q = q.reshape(B, N, num_heads, d).transpose(0, 2, 1, 3)
    if sr_ratio > 1:
        R = sr_ratio
        xi = x.reshape(B, h // R, R, w // R, R, C).transpose(0, 1, 3, 2, 4, 5)
        patches = xi.reshape(B, (h // R) * (w // R), R * R * C)
        y = patches @ params["w_sr"] + params["b_sr"]
        mu = y.mean(-1, keepdims=True)
        var = ((y - mu) ** 2).mean(-1, keepdims=True)
        xk = (y - mu) / jnp.sqrt(var + 1e-5) * params["ln_gamma"] + params["ln_beta"]
    else:
        xk = x
    Nk = xk.shape[1]
    kv = xk @ params["wkv"] + params["bkv"]                         # (B, Nk, 2C)
    k = kv[..., :C].reshape(B, Nk, num_heads, d).transpose(0, 2, 1, 3)
    v = kv[..., C:].reshape(B, Nk, num_heads, d).transpose(0, 2, 1, 3)
    attn = jax.nn.softmax(q @ k.transpose(0, 1, 3, 2) * scale, axis=-1)
    o = (attn @ v).transpose(0, 2, 1, 3).reshape(B, N, C)
    return o @ params["wp"] + params["bp"]


if __name__ == "__main__":
    B, C, H, W = 2, 32, 8, 8
    num_heads, dropout_p = 4, 0.0
    N = H * W
    R = 2                                                  # sr_ratio for SR path

    key = jax.random.PRNGKey(0)
    ks = jax.random.split(key, 12)

    def init(k, shape, s=0.05):
        return jax.random.normal(k, shape, jnp.float32) * s

    params = {
        "wq": init(ks[0], (C, C)), "bq": init(ks[1], (C,)),
        "wkv": init(ks[2], (C, 2 * C)), "bkv": init(ks[3], (2 * C,)),
        "wp": init(ks[4], (C, C)), "bp": init(ks[5], (C,)),
        "w_sr": init(ks[6], (R * R * C, C)), "b_sr": init(ks[7], (C,)),
        "ln_gamma": jnp.ones((C,), jnp.float32),
        "ln_beta": jnp.zeros((C,), jnp.float32),
    }

    x = jax.random.normal(ks[8], (B, N, C), jnp.float32)

    # --- sr_ratio = 2, f32 MXU operands (exact path) -------------------------
    ref2 = reference(x, H, W, params, num_heads, 2)
    out2 = efficient_self_attention_forward(x, H, W, params, num_heads, 2, dropout_p)
    out2 = jax.block_until_ready(out2)
    assert out2.shape == (B, N, C)
    err2 = float(jnp.max(jnp.abs(out2 - ref2)))
    assert jnp.allclose(out2, ref2, atol=5e-3, rtol=1e-2), f"sr=2 f32 max err {err2}"

    # --- sr_ratio = 1 (no spatial reduction), f32 ----------------------------
    ref1 = reference(x, H, W, params, num_heads, 1)
    out1 = efficient_self_attention_forward(x, H, W, params, num_heads, 1, dropout_p)
    out1 = jax.block_until_ready(out1)
    err1 = float(jnp.max(jnp.abs(out1 - ref1)))
    assert jnp.allclose(out1, ref1, atol=5e-3, rtol=1e-2), f"sr=1 f32 max err {err1}"

    # --- sr_ratio = 2, bf16 MXU operands (v6e/v7x path) — loose tolerance ----
    out_bf = efficient_self_attention_forward(x, H, W, params, num_heads, 2,
                                              dropout_p, mxu_dtype=jnp.bfloat16)
    out_bf = jax.block_until_ready(out_bf)
    err_bf = float(jnp.max(jnp.abs(out_bf.astype(jnp.float32) - ref2)))
    assert err_bf < 5e-2, f"bf16 max err {err_bf}"

    print("KERNEL_OK")
</pallas_src>

<mosaic_0001>
module attributes {stable_mosaic.version = 11 : i64} {
  func.func @_fused_attn_kernel(%arg0: i32, %arg1: i32, %arg2: memref<1x64x32xf32, #tpu.memory_space<vmem>>, %arg3: memref<1x16x128xf32, #tpu.memory_space<vmem>>, %arg4: memref<128x32xf32, #tpu.memory_space<vmem>>, %arg5: memref<1x32xf32, #tpu.memory_space<vmem>>, %arg6: memref<1x32xf32, #tpu.memory_space<vmem>>, %arg7: memref<1x32xf32, #tpu.memory_space<vmem>>, %arg8: memref<32x32xf32, #tpu.memory_space<vmem>>, %arg9: memref<1x32xf32, #tpu.memory_space<vmem>>, %arg10: memref<32x64xf32, #tpu.memory_space<vmem>>, %arg11: memref<1x64xf32, #tpu.memory_space<vmem>>, %arg12: memref<32x32xf32, #tpu.memory_space<vmem>>, %arg13: memref<1x32xf32, #tpu.memory_space<vmem>>, %arg14: memref<1x64x32xf32, #tpu.memory_space<vmem>>, %arg15: memref<16x64xf32, #tpu.memory_space<vmem>>) attributes {dimension_semantics = [#tpu.dimension_semantics<parallel>, #tpu.dimension_semantics<arbitrary>], iteration_bounds = array<i64: 2, 1>, scalar_prefetch = 0 : i64, scratch_operands = 1 : i64, tpu.core_type = #tpu.core_type<tc>, window_params = [{transform_indices = @transform_0, window_bounds = array<i64: 1, 64, 32>}, {transform_indices = @transform_1, window_bounds = array<i64: 1, 16, 128>}, {pipeline_mode = #tpu.pipeline_mode<synchronous>, transform_indices = @transform_2, window_bounds = array<i64: 128, 32>}, {pipeline_mode = #tpu.pipeline_mode<synchronous>, transform_indices = @transform_3, window_bounds = array<i64: 1, 32>}, {pipeline_mode = #tpu.pipeline_mode<synchronous>, transform_indices = @transform_4, window_bounds = array<i64: 1, 32>}, {pipeline_mode = #tpu.pipeline_mode<synchronous>, transform_indices = @transform_5, window_bounds = array<i64: 1, 32>}, {pipeline_mode = #tpu.pipeline_mode<synchronous>, transform_indices = @transform_6, window_bounds = array<i64: 32, 32>}, {pipeline_mode = #tpu.pipeline_mode<synchronous>, transform_indices = @transform_7, window_bounds = array<i64: 1, 32>}, {pipeline_mode = #tpu.pipeline_mode<synchronous>, transform_indices = @transform_8, window_bounds = array<i64: 32, 64>}, {pipeline_mode = #tpu.pipeline_mode<synchronous>, transform_indices = @transform_9, window_bounds = array<i64: 1, 64>}, {pipeline_mode = #tpu.pipeline_mode<synchronous>, transform_indices = @transform_10, window_bounds = array<i64: 32, 32>}, {pipeline_mode = #tpu.pipeline_mode<synchronous>, transform_indices = @transform_11, window_bounds = array<i64: 1, 32>}, {transform_indices = @transform_12, window_bounds = array<i64: 1, 64, 32>}]} {
    %c0_i32 = arith.constant 0 : i32
    %0 = arith.cmpi eq, %arg1, %c0_i32 : i32
    %1 = arith.extui %0 : i1 to i32
    %c0_i32_0 = arith.constant 0 : i32
    %2 = arith.cmpi ne, %1, %c0_i32_0 : i32
    scf.if %2 {
      %c0_34 = arith.constant 0 : index
      %c0_35 = arith.constant 0 : index
      %c0_36 = arith.constant 0 : index
      %82 = vector.load %arg3[%c0_34, %c0_35, %c0_36] : memref<1x16x128xf32, #tpu.memory_space<vmem>>, vector<1x16x128xf32>
      %83 = vector.shape_cast %82 : vector<1x16x128xf32> to vector<16x128xf32>
      %c0_37 = arith.constant 0 : index
      %c0_38 = arith.constant 0 : index
      %84 = vector.load %arg4[%c0_37, %c0_38] : memref<128x32xf32, #tpu.memory_space<vmem>>, vector<128x32xf32>
      %cst_39 = arith.constant dense<0.000000e+00> : vector<16x32xf32>
      %85 = tpu.matmul %83, %84, %cst_39 {dimension_numbers = #tpu.dot_dimension_numbers<[1], [0], [0], [1], [0, 0, 1, 1], [], []>} : vector<16x128xf32>, vector<128x32xf32>, vector<16x32xf32> -> vector<16x32xf32>
      %c0_40 = arith.constant 0 : index
      %c0_41 = arith.constant 0 : index
      %86 = vector.load %arg5[%c0_40, %c0_41] : memref<1x32xf32, #tpu.memory_space<vmem>>, vector<1x32xf32>
      %87 = vector.broadcast %86 : vector<1x32xf32> to vector<16x32xf32>
      %88 = arith.addf %85, %87 : vector<16x32xf32>
      %cst_42 = arith.constant dense<0.000000e+00> : vector<16xf32>
      %89 = vector.multi_reduction <add>, %88, %cst_42 [1] : vector<16x32xf32> to vector<16xf32>
      %90 = vector.shape_cast %89 : vector<16xf32> to vector<16x1xf32>
      %cst_43 = arith.constant 3.200000e+01 : f32
      %91 = vector.broadcast %cst_43 : f32 to vector<16x1xf32>
      %92 = arith.divf %90, %91 : vector<16x1xf32>
      %93 = vector.broadcast %92 : vector<16x1xf32> to vector<16x32xf32>
      %94 = arith.subf %88, %93 : vector<16x32xf32>
      %95 = arith.mulf %94, %94 : vector<16x32xf32>
      %cst_44 = arith.constant dense<0.000000e+00> : vector<16xf32>
      %96 = vector.multi_reduction <add>, %95, %cst_44 [1] : vector<16x32xf32> to vector<16xf32>
      %97 = vector.shape_cast %96 : vector<16xf32> to vector<16x1xf32>
      %cst_45 = arith.constant 3.200000e+01 : f32
      %98 = vector.broadcast %cst_45 : f32 to vector<16x1xf32>
      %99 = arith.divf %97, %98 : vector<16x1xf32>
      %100 = vector.broadcast %92 : vector<16x1xf32> to vector<16x32xf32>
      %101 = arith.subf %88, %100 : vector<16x32xf32>
      %cst_46 = arith.constant 9.99999974E-6 : f32
      %102 = vector.broadcast %cst_46 : f32 to vector<16x1xf32>
      %103 = arith.addf %99, %102 : vector<16x1xf32>
      %104 = math.rsqrt %103 : vector<16x1xf32>
      %105 = vector.broadcast %104 : vector<16x1xf32> to vector<16x32xf32>
      %106 = arith.mulf %101, %105 : vector<16x32xf32>
      %c0_47 = arith.constant 0 : index
      %c0_48 = arith.constant 0 : index
      %107 = vector.load %arg6[%c0_47, %c0_48] : memref<1x32xf32, #tpu.memory_space<vmem>>, vector<1x32xf32>
      %108 = vector.broadcast %107 : vector<1x32xf32> to vector<16x32xf32>
      %109 = arith.mulf %106, %108 : vector<16x32xf32>
      %c0_49 = arith.constant 0 : index
      %c0_50 = arith.constant 0 : index
      %110 = vector.load %arg7[%c0_49, %c0_50] : memref<1x32xf32, #tpu.memory_space<vmem>>, vector<1x32xf32>
      %111 = vector.broadcast %110 : vector<1x32xf32> to vector<16x32xf32>
      %112 = arith.addf %109, %111 : vector<16x32xf32>
      %c0_51 = arith.constant 0 : index
      %c0_52 = arith.constant 0 : index
      %113 = vector.load %arg10[%c0_51, %c0_52] : memref<32x64xf32, #tpu.memory_space<vmem>>, vector<32x64xf32>
      %cst_53 = arith.constant dense<0.000000e+00> : vector<16x64xf32>
      %114 = tpu.matmul %112, %113, %cst_53 {dimension_numbers = #tpu.dot_dimension_numbers<[1], [0], [0], [1], [0, 0, 1, 1], [], []>} : vector<16x32xf32>, vector<32x64xf32>, vector<16x64xf32> -> vector<16x64xf32>
      %c0_54 = arith.constant 0 : index
      %c0_55 = arith.constant 0 : index
      %115 = vector.load %arg11[%c0_54, %c0_55] : memref<1x64xf32, #tpu.memory_space<vmem>>, vector<1x64xf32>
      %116 = vector.broadcast %115 : vector<1x64xf32> to vector<16x64xf32>
      %117 = arith.addf %114, %116 : vector<16x64xf32>
      %c0_56 = arith.constant 0 : index
      %c0_57 = arith.constant 0 : index
      %118 = vector.load %arg15[%c0_56, %c0_57] : memref<16x64xf32, #tpu.memory_space<vmem>>, vector<16x64xf32>
      tpu.vector_store %arg15[%c0_56, %c0_57], %117 {strides = array<i32>} : memref<16x64xf32, #tpu.memory_space<vmem>>, vector<16x64xf32>,
    } else {
    }
    %c0 = arith.constant 0 : index
    %c0_1 = arith.constant 0 : index
    %c0_2 = arith.constant 0 : index
    %3 = vector.load %arg2[%c0, %c0_1, %c0_2] : memref<1x64x32xf32, #tpu.memory_space<vmem>>, vector<1x64x32xf32>
    %4 = vector.shape_cast %3 : vector<1x64x32xf32> to vector<64x32xf32>
    %c0_3 = arith.constant 0 : index
    %c0_4 = arith.constant 0 : index
    %5 = vector.load %arg8[%c0_3, %c0_4] : memref<32x32xf32, #tpu.memory_space<vmem>>, vector<32x32xf32>
    %cst = arith.constant dense<0.000000e+00> : vector<64x32xf32>
    %6 = tpu.matmul %4, %5, %cst {dimension_numbers = #tpu.dot_dimension_numbers<[1], [0], [0], [1], [0, 0, 1, 1], [], []>} : vector<64x32xf32>, vector<32x32xf32>, vector<64x32xf32> -> vector<64x32xf32>
    %c0_5 = arith.constant 0 : index
    %c0_6 = arith.constant 0 : index
    %7 = vector.load %arg9[%c0_5, %c0_6] : memref<1x32xf32, #tpu.memory_space<vmem>>, vector<1x32xf32>
    %8 = vector.broadcast %7 : vector<1x32xf32> to vector<64x32xf32>
    %9 = arith.addf %6, %8 : vector<64x32xf32>
    %cst_7 = arith.constant 0.353553385 : f32
    %10 = vector.broadcast %cst_7 : f32 to vector<64x32xf32>
    %11 = arith.mulf %9, %10 : vector<64x32xf32>
    %c0_8 = arith.constant 0 : index
    %c0_9 = arith.constant 0 : index
    %12 = vector.load %arg15[%c0_8, %c0_9] : memref<16x64xf32, #tpu.memory_space<vmem>>, vector<16x64xf32>
    %13 = vector.extract_strided_slice %11 {offsets = [0, 0], sizes = [64, 8], strides = [1, 1]} : vector<64x32xf32> to vector<64x8xf32>
    %14 = vector.extract_strided_slice %12 {offsets = [0, 0], sizes = [16, 8], strides = [1, 1]} : vector<16x64xf32> to vector<16x8xf32>
    %15 = vector.extract_strided_slice %12 {offsets = [0, 32], sizes = [16, 8], strides = [1, 1]} : vector<16x64xf32> to vector<16x8xf32>
    %cst_10 = arith.constant dense<0.000000e+00> : vector<64x16xf32>
    %16 = tpu.matmul %13, %14, %cst_10 {dimension_numbers = #tpu.dot_dimension_numbers<[1], [1], [0], [0], [0, 0, 1, 0], [], []>} : vector<64x8xf32>, vector<16x8xf32>, vector<64x16xf32> -> vector<64x16xf32>
    %cst_11 = arith.constant dense<0xFF800000> : vector<64xf32>
    %17 = vector.multi_reduction <maximumf>, %16, %cst_11 [1] : vector<64x16xf32> to vector<64xf32>
    %18 = vector.shape_cast %17 : vector<64xf32> to vector<64x1xf32>
    %19 = vector.broadcast %18 : vector<64x1xf32> to vector<64x16xf32>
    %20 = arith.subf %16, %19 : vector<64x16xf32>
    %21 = math.exp %20 : vector<64x16xf32>
    %cst_12 = arith.constant dense<0.000000e+00> : vector<64x8xf32>
    %22 = tpu.matmul %21, %15, %cst_12 {dimension_numbers = #tpu.dot_dimension_numbers<[1], [0], [0], [1], [0, 0, 1, 1], [], []>} : vector<64x16xf32>, vector<16x8xf32>, vector<64x8xf32> -> vector<64x8xf32>
    %cst_13 = arith.constant dense<0.000000e+00> : vector<64xf32>
    %23 = vector.multi_reduction <add>, %21, %cst_13 [1] : vector<64x16xf32> to vector<64xf32>
    %24 = vector.shape_cast %23 : vector<64xf32> to vector<64x1xf32>
    %25 = tpu.reciprocal %24 {approx = true} : vector<64x1xf32> -> vector<64x1xf32>
    %26 = vector.broadcast %25 : vector<64x1xf32> to vector<64x8xf32>
    %27 = arith.mulf %22, %26 : vector<64x8xf32>
    %28 = vector.extract_strided_slice %11 {offsets = [0, 8], sizes = [64, 8], strides = [1, 1]} : vector<64x32xf32> to vector<64x8xf32>
    %29 = vector.extract_strided_slice %12 {offsets = [0, 8], sizes = [16, 8], strides = [1, 1]} : vector<16x64xf32> to vector<16x8xf32>
    %30 = vector.extract_strided_slice %12 {offsets = [0, 40], sizes = [16, 8], strides = [1, 1]} : vector<16x64xf32> to vector<16x8xf32>
    %cst_14 = arith.constant dense<0.000000e+00> : vector<64x16xf32>
    %31 = tpu.matmul %28, %29, %cst_14 {dimension_numbers = #tpu.dot_dimension_numbers<[1], [1], [0], [0], [0, 0, 1, 0], [], []>} : vector<64x8xf32>, vector<16x8xf32>, vector<64x16xf32> -> vector<64x16xf32>
    %cst_15 = arith.constant dense<0xFF800000> : vector<64xf32>
    %32 = vector.multi_reduction <maximumf>, %31, %cst_15 [1] : vector<64x16xf32> to vector<64xf32>
    %33 = vector.shape_cast %32 : vector<64xf32> to vector<64x1xf32>
    %34 = vector.broadcast %33 : vector<64x1xf32> to vector<64x16xf32>
    %35 = arith.subf %31, %34 : vector<64x16xf32>
    %36 = math.exp %35 : vector<64x16xf32>
    %cst_16 = arith.constant dense<0.000000e+00> : vector<64x8xf32>
    %37 = tpu.matmul %36, %30, %cst_16 {dimension_numbers = #tpu.dot_dimension_numbers<[1], [0], [0], [1], [0, 0, 1, 1], [], []>} : vector<64x16xf32>, vector<16x8xf32>, vector<64x8xf32> -> vector<64x8xf32>
    %cst_17 = arith.constant dense<0.000000e+00> : vector<64xf32>
    %38 = vector.multi_reduction <add>, %36, %cst_17 [1] : vector<64x16xf32> to vector<64xf32>
    %39 = vector.shape_cast %38 : vector<64xf32> to vector<64x1xf32>
    %40 = tpu.reciprocal %39 {approx = true} : vector<64x1xf32> -> vector<64x1xf32>
    %41 = vector.broadcast %40 : vector<64x1xf32> to vector<64x8xf32>
    %42 = arith.mulf %37, %41 : vector<64x8xf32>
    %43 = vector.extract_strided_slice %11 {offsets = [0, 16], sizes = [64, 8], strides = [1, 1]} : vector<64x32xf32> to vector<64x8xf32>
    %44 = vector.extract_strided_slice %12 {offsets = [0, 16], sizes = [16, 8], strides = [1, 1]} : vector<16x64xf32> to vector<16x8xf32>
    %45 = vector.extract_strided_slice %12 {offsets = [0, 48], sizes = [16, 8], strides = [1, 1]} : vector<16x64xf32> to vector<16x8xf32>
    %cst_18 = arith.constant dense<0.000000e+00> : vector<64x16xf32>
    %46 = tpu.matmul %43, %44, %cst_18 {dimension_numbers = #tpu.dot_dimension_numbers<[1], [1], [0], [0], [0, 0, 1, 0], [], []>} : vector<64x8xf32>, vector<16x8xf32>, vector<64x16xf32> -> vector<64x16xf32>
    %cst_19 = arith.constant dense<0xFF800000> : vector<64xf32>
    %47 = vector.multi_reduction <maximumf>, %46, %cst_19 [1] : vector<64x16xf32> to vector<64xf32>
    %48 = vector.shape_cast %47 : vector<64xf32> to vector<64x1xf32>
    %49 = vector.broadcast %48 : vector<64x1xf32> to vector<64x16xf32>
    %50 = arith.subf %46, %49 : vector<64x16xf32>
    %51 = math.exp %50 : vector<64x16xf32>
    %cst_20 = arith.constant dense<0.000000e+00> : vector<64x8xf32>
    %52 = tpu.matmul %51, %45, %cst_20 {dimension_numbers = #tpu.dot_dimension_numbers<[1], [0], [0], [1], [0, 0, 1, 1], [], []>} : vector<64x16xf32>, vector<16x8xf32>, vector<64x8xf32> -> vector<64x8xf32>
    %cst_21 = arith.constant dense<0.000000e+00> : vector<64xf32>
    %53 = vector.multi_reduction <add>, %51, %cst_21 [1] : vector<64x16xf32> to vector<64xf32>
    %54 = vector.shape_cast %53 : vector<64xf32> to vector<64x1xf32>
    %55 = tpu.reciprocal %54 {approx = true} : vector<64x1xf32> -> vector<64x1xf32>
    %56 = vector.broadcast %55 : vector<64x1xf32> to vector<64x8xf32>
    %57 = arith.mulf %52, %56 : vector<64x8xf32>
    %58 = vector.extract_strided_slice %11 {offsets = [0, 24], sizes = [64, 8], strides = [1, 1]} : vector<64x32xf32> to vector<64x8xf32>
    %59 = vector.extract_strided_slice %12 {offsets = [0, 24], sizes = [16, 8], strides = [1, 1]} : vector<16x64xf32> to vector<16x8xf32>
    %60 = vector.extract_strided_slice %12 {offsets = [0, 56], sizes = [16, 8], strides = [1, 1]} : vector<16x64xf32> to vector<16x8xf32>
    %cst_22 = arith.constant dense<0.000000e+00> : vector<64x16xf32>
    %61 = tpu.matmul %58, %59, %cst_22 {dimension_numbers = #tpu.dot_dimension_numbers<[1], [1], [0], [0], [0, 0, 1, 0], [], []>} : vector<64x8xf32>, vector<16x8xf32>, vector<64x16xf32> -> vector<64x16xf32>
    %cst_23 = arith.constant dense<0xFF800000> : vector<64xf32>
    %62 = vector.multi_reduction <maximumf>, %61, %cst_23 [1] : vector<64x16xf32> to vector<64xf32>
    %63 = vector.shape_cast %62 : vector<64xf32> to vector<64x1xf32>
    %64 = vector.broadcast %63 : vector<64x1xf32> to vector<64x16xf32>
    %65 = arith.subf %61, %64 : vector<64x16xf32>
    %66 = math.exp %65 : vector<64x16xf32>
    %cst_24 = arith.constant dense<0.000000e+00> : vector<64x8xf32>
    %67 = tpu.matmul %66, %60, %cst_24 {dimension_numbers = #tpu.dot_dimension_numbers<[1], [0], [0], [1], [0, 0, 1, 1], [], []>} : vector<64x16xf32>, vector<16x8xf32>, vector<64x8xf32> -> vector<64x8xf32>
    %cst_25 = arith.constant dense<0.000000e+00> : vector<64xf32>
    %68 = vector.multi_reduction <add>, %66, %cst_25 [1] : vector<64x16xf32> to vector<64xf32>
    %69 = vector.shape_cast %68 : vector<64xf32> to vector<64x1xf32>
    %70 = tpu.reciprocal %69 {approx = true} : vector<64x1xf32> -> vector<64x1xf32>
    %71 = vector.broadcast %70 : vector<64x1xf32> to vector<64x8xf32>
    %72 = arith.mulf %67, %71 : vector<64x8xf32>
    %73 = tpu.concatenate %27, %42, %57, %72 in 1 : vector<64x8xf32>, vector<64x8xf32>, vector<64x8xf32>, vector<64x8xf32> -> vector<64x32xf32>
    %c0_26 = arith.constant 0 : index
    %c0_27 = arith.constant 0 : index
    %74 = vector.load %arg12[%c0_26, %c0_27] : memref<32x32xf32, #tpu.memory_space<vmem>>, vector<32x32xf32>
    %cst_28 = arith.constant dense<0.000000e+00> : vector<64x32xf32>
    %75 = tpu.matmul %73, %74, %cst_28 {dimension_numbers = #tpu.dot_dimension_numbers<[1], [0], [0], [1], [0, 0, 1, 1], [], []>} : vector<64x32xf32>, vector<32x32xf32>, vector<64x32xf32> -> vector<64x32xf32>
    %c0_29 = arith.constant 0 : index
    %c0_30 = arith.constant 0 : index
    %76 = vector.load %arg13[%c0_29, %c0_30] : memref<1x32xf32, #tpu.memory_space<vmem>>, vector<1x32xf32>
    %77 = vector.broadcast %76 : vector<1x32xf32> to vector<64x32xf32>
    %78 = arith.addf %75, %77 : vector<64x32xf32>
    %c0_31 = arith.constant 0 : index
    %c0_32 = arith.constant 0 : index
    %c0_33 = arith.constant 0 : index
    %79 = vector.load %arg14[%c0_31, %c0_32, %c0_33] : memref<1x64x32xf32, #tpu.memory_space<vmem>>, vector<1x64x32xf32>
    %80 = vector.shape_cast %79 : vector<1x64x32xf32> to vector<64x32xf32>
    %81 = vector.shape_cast %78 : vector<64x32xf32> to vector<1x64x32xf32>
    tpu.vector_store %arg14[%c0_31, %c0_32, %c0_33], %81 {strides = array<i32>} : memref<1x64x32xf32, #tpu.memory_space<vmem>>, vector<1x64x32xf32>,
    return
  }
  func.func @transform_0(%arg0: i32, %arg1: i32) -> (i32, i32, i32) {
    %c0_i32 = arith.constant 0 : i32
    %c0_i32_0 = arith.constant 0 : i32
    return %arg0, %arg1, %c0_i32 : i32, i32, i32
  }
  func.func @transform_1(%arg0: i32, %arg1: i32) -> (i32, i32, i32) {
    %c0_i32 = arith.constant 0 : i32
    %c0_i32_0 = arith.constant 0 : i32
    %c0_i32_1 = arith.constant 0 : i32
    return %arg0, %c0_i32, %c0_i32_0 : i32, i32, i32
  }
  func.func @transform_2(%arg0: i32, %arg1: i32) -> (i32, i32) {
    %c0_i32 = arith.constant 0 : i32
    %c0_i32_0 = arith.constant 0 : i32
    %c0_i32_1 = arith.constant 0 : i32
    return %c0_i32, %c0_i32_0 : i32, i32
  }
  func.func @transform_3(%arg0: i32, %arg1: i32) -> (i32, i32) {
    %c0_i32 = arith.constant 0 : i32
    %c0_i32_0 = arith.constant 0 : i32
    %c0_i32_1 = arith.constant 0 : i32
    return %c0_i32, %c0_i32_0 : i32, i32
  }
  func.func @transform_4(%arg0: i32, %arg1: i32) -> (i32, i32) {
    %c0_i32 = arith.constant 0 : i32
    %c0_i32_0 = arith.constant 0 : i32
    %c0_i32_1 = arith.constant 0 : i32
    return %c0_i32, %c0_i32_0 : i32, i32
  }
  func.func @transform_5(%arg0: i32, %arg1: i32) -> (i32, i32) {
    %c0_i32 = arith.constant 0 : i32
    %c0_i32_0 = arith.constant 0 : i32
    %c0_i32_1 = arith.constant 0 : i32
    return %c0_i32, %c0_i32_0 : i32, i32
  }
  func.func @transform_6(%arg0: i32, %arg1: i32) -> (i32, i32) {
    %c0_i32 = arith.constant 0 : i32
    %c0_i32_0 = arith.constant 0 : i32
    %c0_i32_1 = arith.constant 0 : i32
    return %c0_i32, %c0_i32_0 : i32, i32
  }
  func.func @transform_7(%arg0: i32, %arg1: i32) -> (i32, i32) {
    %c0_i32 = arith.constant 0 : i32
    %c0_i32_0 = arith.constant 0 : i32
    %c0_i32_1 = arith.constant 0 : i32
    return %c0_i32, %c0_i32_0 : i32, i32
  }
  func.func @transform_8(%arg0: i32, %arg1: i32) -> (i32, i32) {
    %c0_i32 = arith.constant 0 : i32
    %c0_i32_0 = arith.constant 0 : i32
    %c0_i32_1 = arith.constant 0 : i32
    return %c0_i32, %c0_i32_0 : i32, i32
  }
  func.func @transform_9(%arg0: i32, %arg1: i32) -> (i32, i32) {
    %c0_i32 = arith.constant 0 : i32
    %c0_i32_0 = arith.constant 0 : i32
    %c0_i32_1 = arith.constant 0 : i32
    return %c0_i32, %c0_i32_0 : i32, i32
  }
  func.func @transform_10(%arg0: i32, %arg1: i32) -> (i32, i32) {
    %c0_i32 = arith.constant 0 : i32
    %c0_i32_0 = arith.constant 0 : i32
    %c0_i32_1 = arith.constant 0 : i32
    return %c0_i32, %c0_i32_0 : i32, i32
  }
  func.func @transform_11(%arg0: i32, %arg1: i32) -> (i32, i32) {
    %c0_i32 = arith.constant 0 : i32
    %c0_i32_0 = arith.constant 0 : i32
    %c0_i32_1 = arith.constant 0 : i32
    return %c0_i32, %c0_i32_0 : i32, i32
  }
  func.func @transform_12(%arg0: i32, %arg1: i32) -> (i32, i32, i32) {
    %c0_i32 = arith.constant 0 : i32
    %c0_i32_0 = arith.constant 0 : i32
    return %arg0, %arg1, %c0_i32 : i32, i32, i32
  }
}

</mosaic_0001>

<llo_original>
// kernel: tpu_custom_call.1
$region0: #{tpu_custom_call.1}
  #allocation0 [shape = 'u32[]', space=smem, size = 0x4, offset = 0x4, fixed_abs, tag = 'smem constant byte address 0x4 - core index']
  #allocation1 [shape = 'u32[72,128]{1,0:T(1,128)}', space=vmem, size = 0x9000, scoped, tag = 'internal scratch']
  #allocation2 [shape = 'f32[16,64]{1,0:T(8,128)}', space=vmem, size = 0x2000, scoped, tag = 'scratch operand']
  %s0 = inlined_call_operand.vmem [shape: f32[2,64,32], index: 0, kind: input, shape index: {}]
  %s1 = inlined_call_operand.vmem [shape: f32[2,16,128], index: 1, kind: input, shape index: {}]
  %s2 = inlined_call_operand.vmem [shape: f32[128,32], index: 2, kind: input, shape index: {}]
  %s3 = inlined_call_operand.vmem [shape: f32[1,32], index: 3, kind: input, shape index: {}]
  %s4 = inlined_call_operand.vmem [shape: f32[1,32], index: 4, kind: input, shape index: {}]
  %s5 = inlined_call_operand.vmem [shape: f32[1,32], index: 5, kind: input, shape index: {}]
  %s6 = inlined_call_operand.vmem [shape: f32[32,32], index: 6, kind: input, shape index: {}]
  %s7 = inlined_call_operand.vmem [shape: f32[1,32], index: 7, kind: input, shape index: {}]
  %s8 = inlined_call_operand.vmem [shape: f32[32,64], index: 8, kind: input, shape index: {}]
  %s9 = inlined_call_operand.vmem [shape: f32[1,64], index: 9, kind: input, shape index: {}]
  %s10 = inlined_call_operand.vmem [shape: f32[32,32], index: 10, kind: input, shape index: {}]
  %s11 = inlined_call_operand.vmem [shape: f32[1,32], index: 11, kind: input, shape index: {}]
  %s12 = inlined_call_operand.vmem [shape: f32[2,64,32], index: 12, kind: output, shape index: {}]
  %s13 = sld [smem:[#allocation0]]
  $region85: #{tpu_custom_call.1} parent=0
    _
  %s15 = ssub.s32 1, %s13
  %s16 = scalar_select 0, %s15, %s13
  loop: start=0, step=1, limit=4
  $region2: #{tpu_custom_call.1} parent=0 // loop_pre_header
    _
  $region3: #{tpu_custom_call.1} parent=0 // loop_header
    %s18 = sphi 0, %s22
    %p19 = scmp.ge.s32.totalorder %s18, 4
    %s25 = sphi 0, %s37
    %s26 = sphi 0, %s33
    %s27 = sphi 0, %s25
    %s28 = sphi 0, %s26
    %s29 = sphi 0, %s27
    %s30 = sphi 0, %s28
    %s42 = sphi 0, %s44
    %s45 = sphi 0, %s42
    %s46 = sphi 0, %s45
    %s62 = sphi 0, %s46
    %s68 = sphi 0, %s70
    %s71 = sphi 0, %s68
    %s72 = sphi 0, %s71
    %s88 = sphi 0, %s72
    %s92 = sphi 0, %s92
    %s94 = sphi 0, %s92
    %s95 = sphi 0, %s94
    %s109 = sphi 0, %s95
    %s113 = sphi 0, %s113
    %s115 = sphi 0, %s113
    %s116 = sphi 0, %s115
    %s130 = sphi 0, %s116
    %s134 = sphi 0, %s134
    %s136 = sphi 0, %s134
    %s137 = sphi 0, %s136
    %s151 = sphi 0, %s137
    %s155 = sphi 0, %s155
    %s157 = sphi 0, %s155
    %s158 = sphi 0, %s157
    %s172 = sphi 0, %s158
    %s176 = sphi 0, %s176
    %s178 = sphi 0, %s176
    %s179 = sphi 0, %s178
    %s193 = sphi 0, %s179
    %s197 = sphi 0, %s197
    %s199 = sphi 0, %s197
    %s200 = sphi 0, %s199
    %s214 = sphi 0, %s200
    %s218 = sphi 0, %s218
    %s220 = sphi 0, %s218
    %s221 = sphi 0, %s220
    %s235 = sphi 0, %s221
    %s239 = sphi 0, %s239
    %s241 = sphi 0, %s239
    %s242 = sphi 0, %s241
    %s256 = sphi 0, %s242
    %s260 = sphi 0, %s260
    %s262 = sphi 0, %s260
    %s263 = sphi 0, %s262
    %s277 = sphi 0, %s263
    %s281 = sphi 0, %s281
    %s283 = sphi 0, %s281
    %s284 = sphi 0, %s283
    %s298 = sphi 0, %s284
    %s306 = sphi 0, %s308
    %s309 = sphi 0, %s306
    %s310 = sphi 0, %s309
    %s326 = sphi 0, %s310
  $region4: #{tpu_custom_call.1} parent=0 // loop_header_branch
    %21 = sbr.rel (%p19) target = $region8
  $region5: #{tpu_custom_call.1} parent=0 // loop_body
    %s23 = ssub.s32 %s18, 1
    %s24 = ssub.s32 %s18, 2
    %s31 = sadd.s32 1, %s26
    %p32 = scmp.ge.s32.totalorder %s31, 1
    %s33 = scalar_select %p32, 0, %s31
    %s34 = sadd.s32 1, %s25
    %s35 = scalar_select %p32, %s34, %s25
    %p36 = scmp.ge.s32.totalorder %s35, 2
    %s37 = scalar_select %p36, 0, %s35
    %s38 = ssub.s32 %s25, %s37
    %s39 = ssub.s32 %s26, %s33
    %s40 = sor.u32 %s38, %s39
    %p41 = scmp.eq.s32.totalorder %s40, 0
    %s43 = sadd.s32 %s42, 1
    %s44 = scalar_select %p41, %s42, %s43
    %p47 = pneg %p41
    %p48 = scmp.eq.s32.totalorder %s18, 1
    %p49 = por %p47, %p48
    %p50 = scmp.ne.s32.totalorder %s42, %s45
    %p51 = scmp.eq.s32.totalorder %s18, 0
    %p52 = por %p50, %p51
    %p53 = scmp.ne.s32.totalorder %s42, %s45
    %p54 = scmp.eq.s32.totalorder %s23, 1
    %p55 = por %p53, %p54
    %p56 = scmp.ne.s32.totalorder %s45, %s46
    %p57 = scmp.eq.s32.totalorder %s23, 0
    %p58 = por %p56, %p57
    %p59 = scmp.ne.s32.totalorder %s45, %s46
    %p60 = scmp.eq.s32.totalorder %s24, 1
    %p61 = por %p59, %p60
    %p63 = scmp.ne.s32.totalorder %s46, %s62
    %p64 = scmp.eq.s32.totalorder %s24, 0
    %p65 = por %p63, %p64
    %s66 = ssub.s32 %s25, %s37
    %p67 = scmp.eq.s32.totalorder %s66, 0
    %s69 = sadd.s32 %s68, 1
    %s70 = scalar_select %p67, %s68, %s69
    %p73 = pneg %p67
    %p74 = scmp.eq.s32.totalorder %s18, 1
    %p75 = por %p73, %p74
    %p76 = scmp.ne.s32.totalorder %s68, %s71
    %p77 = scmp.eq.s32.totalorder %s18, 0
    %p78 = por %p76, %p77
    %p79 = scmp.ne.s32.totalorder %s68, %s71
    %p80 = scmp.eq.s32.totalorder %s23, 1
    %p81 = por %p79, %p80
    %p82 = scmp.ne.s32.totalorder %s71, %s72
    %p83 = scmp.eq.s32.totalorder %s23, 0
    %p84 = por %p82, %p83
    %p85 = scmp.ne.s32.totalorder %s71, %s72
    %p86 = scmp.eq.s32.totalorder %s24, 1
    %p87 = por %p85, %p86
    %p89 = scmp.ne.s32.totalorder %s72, %s88
    %p90 = scmp.eq.s32.totalorder %s24, 0
    %p91 = por %p89, %p90
    %s93 = sadd.s32 %s92, 1
    %p96 = scmp.eq.s32.totalorder %s18, 1
    %p97 = scmp.ne.s32.totalorder %s92, %s94
    %p98 = scmp.eq.s32.totalorder %s18, 0
    %p99 = por %p97, %p98
    %p100 = scmp.ne.s32.totalorder %s92, %s94
    %p101 = scmp.eq.s32.totalorder %s23, 1
    %p102 = por %p100, %p101
    %p103 = scmp.ne.s32.totalorder %s94, %s95
    %p104 = scmp.eq.s32.totalorder %s23, 0
    %p105 = por %p103, %p104
    %p106 = scmp.ne.s32.totalorder %s94, %s95
    %p107 = scmp.eq.s32.totalorder %s24, 1
    %p108 = por %p106, %p107
    %p110 = scmp.ne.s32.totalorder %s95, %s109
    %p111 = scmp.eq.s32.totalorder %s24, 0
    %p112 = por %p110, %p111
    %s114 = sadd.s32 %s113, 1
    %p117 = scmp.eq.s32.totalorder %s18, 1
    %p118 = scmp.ne.s32.totalorder %s113, %s115
    %p119 = scmp.eq.s32.totalorder %s18, 0
    %p120 = por %p118, %p119
    %p121 = scmp.ne.s32.totalorder %s113, %s115
    %p122 = scmp.eq.s32.totalorder %s23, 1
    %p123 = por %p121, %p122
    %p124 = scmp.ne.s32.totalorder %s115, %s116
    %p125 = scmp.eq.s32.totalorder %s23, 0
    %p126 = por %p124, %p125
    %p127 = scmp.ne.s32.totalorder %s115, %s116
    %p128 = scmp.eq.s32.totalorder %s24, 1
    %p129 = por %p127, %p128
    %p131 = scmp.ne.s32.totalorder %s116, %s130
    %p132 = scmp.eq.s32.totalorder %s24, 0
    %p133 = por %p131, %p132
    %s135 = sadd.s32 %s134, 1
    %p138 = scmp.eq.s32.totalorder %s18, 1
    %p139 = scmp.ne.s32.totalorder %s134, %s136
    %p140 = scmp.eq.s32.totalorder %s18, 0
    %p141 = por %p139, %p140
    %p142 = scmp.ne.s32.totalorder %s134, %s136
    %p143 = scmp.eq.s32.totalorder %s23, 1
    %p144 = por %p142, %p143
    %p145 = scmp.ne.s32.totalorder %s136, %s137
    %p146 = scmp.eq.s32.totalorder %s23, 0
    %p147 = por %p145, %p146
    %p148 = scmp.ne.s32.totalorder %s136, %s137
    %p149 = scmp.eq.s32.totalorder %s24, 1
    %p150 = por %p148, %p149
    %p152 = scmp.ne.s32.totalorder %s137, %s151
    %p153 = scmp.eq.s32.totalorder %s24, 0
    %p154 = por %p152, %p153
    %s156 = sadd.s32 %s155, 1
    %p159 = scmp.eq.s32.totalorder %s18, 1
    %p160 = scmp.ne.s32.totalorder %s155, %s157
    %p161 = scmp.eq.s32.totalorder %s18, 0
    %p162 = por %p160, %p161
    %p163 = scmp.ne.s32.totalorder %s155, %s157
    %p164 = scmp.eq.s32.totalorder %s23, 1
    %p165 = por %p163, %p164
    %p166 = scmp.ne.s32.totalorder %s157, %s158
    %p167 = scmp.eq.s32.totalorder %s23, 0
    %p168 = por %p166, %p167
    %p169 = scmp.ne.s32.totalorder %s157, %s158
    %p170 = scmp.eq.s32.totalorder %s24, 1
    %p171 = por %p169, %p170
    %p173 = scmp.ne.s32.totalorder %s158, %s172
    %p174 = scmp.eq.s32.totalorder %s24, 0
    %p175 = por %p173, %p174
    %s177 = sadd.s32 %s176, 1
    %p180 = scmp.eq.s32.totalorder %s18, 1
    %p181 = scmp.ne.s32.totalorder %s176, %s178
    %p182 = scmp.eq.s32.totalorder %s18, 0
    %p183 = por %p181, %p182
    %p184 = scmp.ne.s32.totalorder %s176, %s178
    %p185 = scmp.eq.s32.totalorder %s23, 1
    %p186 = por %p184, %p185
    %p187 = scmp.ne.s32.totalorder %s178, %s179
    %p188 = scmp.eq.s32.totalorder %s23, 0
    %p189 = por %p187, %p188
    %p190 = scmp.ne.s32.totalorder %s178, %s179
    %p191 = scmp.eq.s32.totalorder %s24, 1
    %p192 = por %p190, %p191
    %p194 = scmp.ne.s32.totalorder %s179, %s193
    %p195 = scmp.eq.s32.totalorder %s24, 0
    %p196 = por %p194, %p195
    %s198 = sadd.s32 %s197, 1
    %p201 = scmp.eq.s32.totalorder %s18, 1
    %p202 = scmp.ne.s32.totalorder %s197, %s199
    %p203 = scmp.eq.s32.totalorder %s18, 0
    %p204 = por %p202, %p203
    %p205 = scmp.ne.s32.totalorder %s197, %s199
    %p206 = scmp.eq.s32.totalorder %s23, 1
    %p207 = por %p205, %p206
    %p208 = scmp.ne.s32.totalorder %s199, %s200
    %p209 = scmp.eq.s32.totalorder %s23, 0
    %p210 = por %p208, %p209
    %p211 = scmp.ne.s32.totalorder %s199, %s200
    %p212 = scmp.eq.s32.totalorder %s24, 1
    %p213 = por %p211, %p212
    %p215 = scmp.ne.s32.totalorder %s200, %s214
    %p216 = scmp.eq.s32.totalorder %s24, 0
    %p217 = por %p215, %p216
    %s219 = sadd.s32 %s218, 1
    %p222 = scmp.eq.s32.totalorder %s18, 1
    %p223 = scmp.ne.s32.totalorder %s218, %s220
    %p224 = scmp.eq.s32.totalorder %s18, 0
    %p225 = por %p223, %p224
    %p226 = scmp.ne.s32.totalorder %s218, %s220
    %p227 = scmp.eq.s32.totalorder %s23, 1
    %p228 = por %p226, %p227
    %p229 = scmp.ne.s32.totalorder %s220, %s221
    %p230 = scmp.eq.s32.totalorder %s23, 0
    %p231 = por %p229, %p230
    %p232 = scmp.ne.s32.totalorder %s220, %s221
    %p233 = scmp.eq.s32.totalorder %s24, 1
    %p234 = por %p232, %p233
    %p236 = scmp.ne.s32.totalorder %s221, %s235
    %p237 = scmp.eq.s32.totalorder %s24, 0
    %p238 = por %p236, %p237
    %s240 = sadd.s32 %s239, 1
    %p243 = scmp.eq.s32.totalorder %s18, 1
    %p244 = scmp.ne.s32.totalorder %s239, %s241
    %p245 = scmp.eq.s32.totalorder %s18, 0
    %p246 = por %p244, %p245
    %p247 = scmp.ne.s32.totalorder %s239, %s241
    %p248 = scmp.eq.s32.totalorder %s23, 1
    %p249 = por %p247, %p248
    %p250 = scmp.ne.s32.totalorder %s241, %s242
    %p251 = scmp.eq.s32.totalorder %s23, 0
    %p252 = por %p250, %p251
    %p253 = scmp.ne.s32.totalorder %s241, %s242
    %p254 = scmp.eq.s32.totalorder %s24, 1
    %p255 = por %p253, %p254
    %p257 = scmp.ne.s32.totalorder %s242, %s256
    %p258 = scmp.eq.s32.totalorder %s24, 0
    %p259 = por %p257, %p258
    %s261 = sadd.s32 %s260, 1
    %p264 = scmp.eq.s32.totalorder %s18, 1
    %p265 = scmp.ne.s32.totalorder %s260, %s262
    %p266 = scmp.eq.s32.totalorder %s18, 0
    %p267 = por %p265, %p266
    %p268 = scmp.ne.s32.totalorder %s260, %s262
    %p269 = scmp.eq.s32.totalorder %s23, 1
    %p270 = por %p268, %p269
    %p271 = scmp.ne.s32.totalorder %s262, %s263
    %p272 = scmp.eq.s32.totalorder %s23, 0
    %p273 = por %p271, %p272
    %p274 = scmp.ne.s32.totalorder %s262, %s263
    %p275 = scmp.eq.s32.totalorder %s24, 1
    %p276 = por %p274, %p275
    %p278 = scmp.ne.s32.totalorder %s263, %s277
    %p279 = scmp.eq.s32.totalorder %s24, 0
    %p280 = por %p278, %p279
    %s282 = sadd.s32 %s281, 1
    %p285 = scmp.eq.s32.totalorder %s18, 1
    %p286 = scmp.ne.s32.totalorder %s281, %s283
    %p287 = scmp.eq.s32.totalorder %s18, 0
    %p288 = por %p286, %p287
    %p289 = scmp.ne.s32.totalorder %s281, %s283
    %p290 = scmp.eq.s32.totalorder %s23, 1
    %p291 = por %p289, %p290
    %p292 = scmp.ne.s32.totalorder %s283, %s284
    %p293 = scmp.eq.s32.totalorder %s23, 0
    %p294 = por %p292, %p293
    %p295 = scmp.ne.s32.totalorder %s283, %s284
    %p296 = scmp.eq.s32.totalorder %s24, 1
    %p297 = por %p295, %p296
    %p299 = scmp.ne.s32.totalorder %s284, %s298
    %p300 = scmp.eq.s32.totalorder %s24, 0
    %p301 = por %p299, %p300
    %s302 = ssub.s32 %s25, %s37
    %s303 = ssub.s32 %s26, %s33
    %s304 = sor.u32 %s302, %s303
    %p305 = scmp.eq.s32.totalorder %s304, 0
    %s307 = sadd.s32 %s306, 1
    %s308 = scalar_select %p305, %s306, %s307
    %p311 = pneg %p305
    %p312 = scmp.eq.s32.totalorder %s18, 1
    %p313 = por %p311, %p312
    %p314 = scmp.ne.s32.totalorder %s306, %s309
    %p315 = scmp.eq.s32.totalorder %s18, 0
    %p316 = por %p314, %p315
    %p317 = scmp.ne.s32.totalorder %s306, %s309
    %p318 = scmp.eq.s32.totalorder %s23, 1
    %p319 = por %p317, %p318
    %p320 = scmp.ne.s32.totalorder %s309, %s310
    %p321 = scmp.eq.s32.totalorder %s23, 0
    %p322 = por %p320, %p321
    %p323 = scmp.ne.s32.totalorder %s309, %s310
    %p324 = scmp.eq.s32.totalorder %s24, 1
    %p325 = por %p323, %p324
    %p327 = scmp.ne.s32.totalorder %s310, %s326
    %p328 = scmp.eq.s32.totalorder %s24, 0
    %p329 = por %p327, %p328
    %p330 = scmp.le.s32.totalorder 1, %s18
    %p331 = scmp.lt.s32.totalorder %s18, 3
    %p332 = pnand %p330, %p331
    %p333 = pneg %p332
    // Predicated region
    $region9: #{tpu_custom_call.1} parent=5 // pred_check
      _
    $region10: #{tpu_custom_call.1} parent=5 // pred_check_branch
      %335 = sbr.rel (%p332) target = $region12
    $region11: #{tpu_custom_call.1} parent=5 // pred_region
      %s336 = ssub.s32 %s18, 1
      // Predicated region
      $region13: #{tpu_custom_call.1} parent=11 // pred_check
        %p337 = pneg %p105
      $region14: #{tpu_custom_call.1} parent=11 // pred_check_branch
        %339 = sbr.rel (%p337) target = $region16
      $region15: #{tpu_custom_call.1} parent=11 // pred_region
        _
      $region16: #{tpu_custom_call.1} parent=11 // pred_fallthru
        _
      // Predicated region
      $region17: #{tpu_custom_call.1} parent=11 // pred_check
        %p340 = pneg %p126
      $region18: #{tpu_custom_call.1} parent=11 // pred_check_branch
        %342 = sbr.rel (%p340) target = $region20
      $region19: #{tpu_custom_call.1} parent=11 // pred_region
        _
      $region20: #{tpu_custom_call.1} parent=11 // pred_fallthru
        _
      // Predicated region
      $region21: #{tpu_custom_call.1} parent=11 // pred_check
        %p343 = pneg %p147
      $region22: #{tpu_custom_call.1} parent=11 // pred_check_branch
        %345 = sbr.rel (%p343) target = $region24
      $region23: #{tpu_custom_call.1} parent=11 // pred_region
        _
      $region24: #{tpu_custom_call.1} parent=11 // pred_fallthru
        _
      // Predicated region
      $region25: #{tpu_custom_call.1} parent=11 // pred_check
        %p346 = pneg %p168
      $region26: #{tpu_custom_call.1} parent=11 // pred_check_branch
        %348 = sbr.rel (%p346) target = $region28
      $region27: #{tpu_custom_call.1} parent=11 // pred_region
        _
      $region28: #{tpu_custom_call.1} parent=11 // pred_fallthru
        _
      // Predicated region
      $region29: #{tpu_custom_call.1} parent=11 // pred_check
        %p349 = pneg %p189
      $region30: #{tpu_custom_call.1} parent=11 // pred_check_branch
        %351 = sbr.rel (%p349) target = $region32
      $region31: #{tpu_custom_call.1} parent=11 // pred_region
        _
      $region32: #{tpu_custom_call.1} parent=11 // pred_fallthru
        _
      // Predicated region
      $region33: #{tpu_custom_call.1} parent=11 // pred_check
        %p352 = pneg %p210
      $region34: #{tpu_custom_call.1} parent=11 // pred_check_branch
        %354 = sbr.rel (%p352) target = $region36
      $region35: #{tpu_custom_call.1} parent=11 // pred_region
        _
      $region36: #{tpu_custom_call.1} parent=11 // pred_fallthru
        _
      // Predicated region
      $region37: #{tpu_custom_call.1} parent=11 // pred_check
        %p355 = pneg %p231
      $region38: #{tpu_custom_call.1} parent=11 // pred_check_branch
        %357 = sbr.rel (%p355) target = $region40
      $region39: #{tpu_custom_call.1} parent=11 // pred_region
        _
      $region40: #{tpu_custom_call.1} parent=11 // pred_fallthru
        _
      // Predicated region
      $region41: #{tpu_custom_call.1} parent=11 // pred_check
        %p358 = pneg %p252
      $region42: #{tpu_custom_call.1} parent=11 // pred_check_branch
        %360 = sbr.rel (%p358) target = $region44
      $region43: #{tpu_custom_call.1} parent=11 // pred_region
        _
      $region44: #{tpu_custom_call.1} parent=11 // pred_fallthru
        _
      // Predicated region
      $region45: #{tpu_custom_call.1} parent=11 // pred_check
        %p361 = pneg %p273
      $region46: #{tpu_custom_call.1} parent=11 // pred_check_branch
        %363 = sbr.rel (%p361) target = $region48
      $region47: #{tpu_custom_call.1} parent=11 // pred_region
        _
      $region48: #{tpu_custom_call.1} parent=11 // pred_fallthru
        _
      // Predicated region
      $region49: #{tpu_custom_call.1} parent=11 // pred_check
        %p364 = pneg %p294
      $region50: #{tpu_custom_call.1} parent=11 // pred_check_branch
        %366 = sbr.rel (%p364) target = $region52
      $region51: #{tpu_custom_call.1} parent=11 // pred_region
        _
      $region52: #{tpu_custom_call.1} parent=11 // pred_fallthru
        _
    $region12: #{tpu_custom_call.1} parent=5 // pred_fallthru
      _
    %p367 = scmp.lt.s32.totalorder %s18, 2
    // Predicated region
    $region53: #{tpu_custom_call.1} parent=5 // pred_check
      %p368 = pneg %p367
    $region54: #{tpu_custom_call.1} parent=5 // pred_check_branch
      %370 = sbr.rel (%p368) target = $region56
    $region55: #{tpu_custom_call.1} parent=5 // pred_region
      // Predicated region
      $region57: #{tpu_custom_call.1} parent=55 // pred_check
        %p371 = pneg %p52
      $region58: #{tpu_custom_call.1} parent=55 // pred_check_branch
        %373 = sbr.rel (%p371) target = $region60
      $region59: #{tpu_custom_call.1} parent=55 // pred_region
        %s374 = smul.u32 8, %s26
        %p375 = scmp.lt.s32.totalorder %s25, 1
        %s376 = scalar_select %p375, %s25, 1
        %p377 = scmp.lt.s32.totalorder %s374, 7
        %s378 = scalar_select %p377, %s374, 7
        %s379 = smul.addr %s376, 8
        %s380 = sadd.s32 %s378, %s379
        %s381 = smul.addr %s380, 8
        %s382 = scalar_lea.vmem %s0, %s381
        %s383 = smul.u32 8, %s26
      $region60: #{tpu_custom_call.1} parent=55 // pred_fallthru
        _
      // Predicated region
      $region61: #{tpu_custom_call.1} parent=55 // pred_check
        %p384 = pneg %p78
      $region62: #{tpu_custom_call.1} parent=55 // pred_check_branch
        %386 = sbr.rel (%p384) target = $region64
      $region63: #{tpu_custom_call.1} parent=55 // pred_region
        %p387 = scmp.lt.s32.totalorder %s25, 1
        %s388 = scalar_select %p387, %s25, 1
        %s389 = smul.addr %s388, 2
        %s390 = smul.addr %s389, 8
        %s391 = scalar_lea.vmem %s1, %s390
      $region64: #{tpu_custom_call.1} parent=55 // pred_fallthru
        _
    $region56: #{tpu_custom_call.1} parent=5 // pred_fallthru
      _
    %p392 = scmp.le.s32.totalorder 1, %s18
    %p393 = scmp.lt.s32.totalorder %s18, 3
    %p394 = pnand %p392, %p393
    %p395 = pneg %p394
    // Predicated region
    $region65: #{tpu_custom_call.1} parent=5 // pred_check
      _
    $region66: #{tpu_custom_call.1} parent=5 // pred_check_branch
      %397 = sbr.rel (%p394) target = $region68
    $region67: #{tpu_custom_call.1} parent=5 // pred_region
      %s398 = ssub.s32 %s18, 1
      %s399 = smul.u32 8, %s28
      %p400 = scmp.lt.s32.totalorder %s27, 1
      %s401 = scalar_select %p400, %s27, 1
      %p402 = scmp.lt.s32.totalorder %s399, 7
      %s403 = scalar_select %p402, %s399, 7
      %s404 = smul.addr %s401, 8
      %s405 = sadd.s32 %s403, %s404
      %s406 = smul.addr %s405, 8
      %s407 = scalar_lea.vmem %s0, %s406
      %p408 = pneg %p58
      %p409 = pneg %p55
      %p410 = scmp.lt.s32.totalorder %s27, 1
      %s411 = scalar_select %p410, %s27, 1
      %s412 = smul.addr %s411, 2
      %s413 = smul.addr %s412, 8
      %s414 = scalar_lea.vmem %s1, %s413
      %p415 = pneg %p84
      %p416 = pneg %p81
      %p417 = pneg %p105
      %p418 = pneg %p102
      %p419 = pneg %p126
      %p420 = pneg %p123
      %p421 = pneg %p147
      %p422 = pneg %p144
      %p423 = pneg %p168
      %p424 = pneg %p165
      %p425 = pneg %p189
      %p426 = pneg %p186
      %p427 = pneg %p210
      %p428 = pneg %p207
      %p429 = pneg %p231
      %p430 = pneg %p228
      %p431 = pneg %p252
      %p432 = pneg %p249
      %p433 = pneg %p273
      %p434 = pneg %p270
      %p435 = pneg %p294
      %p436 = pneg %p291
      %p437 = pneg %p322
      %p438 = pneg %p319
      %s439 = smul.u32 8, %s28
      %p440 = scmp.lt.s32.totalorder %s27, 1
      %s441 = scalar_select %p440, %s27, 1
      %p442 = scmp.lt.s32.totalorder %s439, 7
      %s443 = scalar_select %p442, %s439, 7
      %s444 = smul.addr %s441, 8
      %s445 = sadd.s32 %s443, %s444
      %s446 = smul.addr %s445, 8
      %s447 = scalar_lea.vmem %s12, %s446
      %s448 = smul.u32 8, %s28
      %p449 = scmp.lt.s32.totalorder %s27, 1
      %s450 = scalar_select %p449, %s27, 1
      %p451 = scmp.lt.s32.totalorder %s448, 7
      %s452 = scalar_select %p451, %s448, 7
      %s453 = smul.addr %s450, 8
      %s454 = sadd.s32 %s452, %s453
      %s455 = smul.addr %s454, 8
      %s456 = scalar_lea.vmem %s0, %s455
      %s457 = smul.u32 8, %s28
      %p458 = scmp.lt.s32.totalorder %s27, 1
      %s459 = scalar_select %p458, %s27, 1
      %s460 = smul.addr %s459, 2
      %s461 = smul.addr %s460, 8
      %s462 = scalar_lea.vmem %s1, %s461
      %s463 = smul.u32 8, %s28
      %p464 = scmp.lt.s32.totalorder %s27, 1
      %s465 = scalar_select %p464, %s27, 1
      %p466 = scmp.lt.s32.totalorder %s463, 7
      %s467 = scalar_select %p466, %s463, 7
      %s468 = smul.addr %s465, 8
      %s469 = sadd.s32 %s467, %s468
      %s470 = smul.addr %s469, 8
      %s471 = scalar_lea.vmem %s12, %s470
      %s472 = smul.u32 8, %s28
      %p473 = scmp.eq.s32.totalorder %s28, 0
      // Predicated region
      $region69: #{tpu_custom_call.1} parent=67 // pred_check
        %p474 = pneg %p473
      $region70: #{tpu_custom_call.1} parent=67 // pred_check_branch
        %476 = sbr.rel (%p474) target = $region72
      $region71: #{tpu_custom_call.1} parent=67 // pred_region
        %v477 = vld [vmem:[%s462] sm:$0xff]
        %v478 = vld [vmem:[%s462 + $0x8] sm:$0xff]
        %v479 = vld [vmem:[%s2] sm:$0xff]
        %v480 = vld [vmem:[%s2 + $0x8] sm:$0xff]
        %v481 = vld [vmem:[%s2 + $0x10] sm:$0xff]
        %v482 = vld [vmem:[%s2 + $0x18] sm:$0xff]
        %v483 = vld [vmem:[%s2 + $0x20] sm:$0xff]
        %v484 = vld [vmem:[%s2 + $0x28] sm:$0xff]
        %v485 = vld [vmem:[%s2 + $0x30] sm:$0xff]
        %v486 = vld [vmem:[%s2 + $0x38] sm:$0xff]
        %v487 = vld [vmem:[%s2 + $0x40] sm:$0xff]
        %v488 = vld [vmem:[%s2 + $0x48] sm:$0xff]
        %v489 = vld [vmem:[%s2 + $0x50] sm:$0xff]
        %v490 = vld [vmem:[%s2 + $0x58] sm:$0xff]
        %v491 = vld [vmem:[%s2 + $0x60] sm:$0xff]
        %v492 = vld [vmem:[%s2 + $0x68] sm:$0xff]
        %v493 = vld [vmem:[%s2 + $0x70] sm:$0xff]
        %v494 = vld [vmem:[%s2 + $0x78] sm:$0xff]
        %v495 = vld [vmem:[%s3] sm:$0x1]
        %v497 = vperm.slane %v495, 0
        %499 = vmatpush.msra.mxu0 %v494
        %500 = vmatpush.msra.mxu0 %v493
        %501 = vmatpush.msra.mxu0 %v492
        %502 = vmatpush.msra.mxu0 %v491
        %503 = vmatpush.msra.mxu0 %v490
        %504 = vmatpush.msra.mxu0 %v489
        %505 = vmatpush.msra.mxu0 %v488
        %506 = vmatpush.msra.mxu0 %v487
        %507 = vmatpush.msra.mxu0 %v486
        %508 = vmatpush.msra.mxu0 %v485
        %509 = vmatpush.msra.mxu0 %v484
        %510 = vmatpush.msra.mxu0 %v483
        %511 = vmatpush.msra.mxu0 %v482
        %512 = vmatpush.msra.mxu0 %v481
        %513 = vmatpush.msra.mxu0 %v480
        %514 = vmatpush.msra.mxu0 %v479
        %515 = vmatmul.f32.gmra.mxu0 %v477
        %v516 = vpop.f32.mrf.mxu0
        %v517 = vadd.f32 %v497, %v516
        %518 = vmatmul.f32.gmra.mxu0 %v478
        %v519 = vpop.f32.mrf.mxu0
        %v520 = vadd.f32 %v497, %v519
        %521 = vdwg.mxu0
        %vm522 = vcmask 261120
        %v523 = vsel %vm522, %v517, 0.0
        %524 = vadd.xlane.f32.xlu0 %v523
        %v525 = vpop.xlane.xlu0 %524
        %v526 = vsel %vm522, %v520, 0.0
        %527 = vadd.xlane.f32.xlu0 %v526
        %v528 = vpop.xlane.xlu0 %527
        %v529 = vrcp.pop 32.0
        %v530 = vmul.f32 32.0, %v529
        %v531 = vsub.f32 1.0, %v530
        %v532 = vmul.f32 %v529, %v531
        %v533 = vadd.f32 %v529, %v532
        %vm534 = vweird.f32 %v529
        %v535 = vsel %vm534, %v529, %v533
        %v536 = vmul.f32 %v525, %v535
        %v537 = vmul.f32 %v528, %v535
        %v538 = vsub.f32 %v517, %v536
        %v539 = vsub.f32 %v520, %v537
        %v540 = vmul.f32 %v538, %v538
        %v541 = vmul.f32 %v539, %v539
        %v542 = vsel %vm522, %v540, 0.0
        %543 = vadd.xlane.f32.xlu0 %v542
        %v544 = vpop.xlane.xlu0 %543
        %v545 = vsel %vm522, %v541, 0.0
        %546 = vadd.xlane.f32.xlu0 %v545
        %v547 = vpop.xlane.xlu0 %546
        %v548 = vmul.f32 %v544, %v535
        %v549 = vmul.f32 %v547, %v535
        %v550 = vadd.f32 %v548, 1e-05
        %v551 = vadd.f32 %v549, 1e-05
        %v552 = vrsqrt.pop %v550
        %v553 = vmul.f32 %v552, %v550
        %v554 = vmul.f32 %v553, %v552
        %v555 = vmul.f32 0.5, %v554
        %v556 = vsub.f32 1.5, %v555
        %v557 = vmul.f32 %v552, %v556
        %vm558 = vweird.f32 %v550
        %vm559 = vweird.f32 %v552
        %vm560 = vmor %vm558, %vm559
        %v561 = vsel %vm560, %v552, %v557
        %v562 = vrsqrt.pop %v551
        %v563 = vmul.f32 %v562, %v551
        %v564 = vmul.f32 %v563, %v562
        %v565 = vmul.f32 0.5, %v564
        %v566 = vsub.f32 1.5, %v565
        %v567 = vmul.f32 %v562, %v566
        %vm568 = vweird.f32 %v551
        %vm569 = vweird.f32 %v562
        %vm570 = vmor %vm568, %vm569
        %v571 = vsel %vm570, %v562, %v567
        %v572 = vmul.f32 %v538, %v561
        %v573 = vmul.f32 %v539, %v571
        %v574 = vld [vmem:[%s4] sm:$0x1]
        %v576 = vperm.slane %v574, 0
        %v578 = vmul.f32 %v572, %v576
        %v579 = vmul.f32 %v573, %v576
        %v580 = vld [vmem:[%s5] sm:$0x1]
        %v582 = vperm.slane %v580, 0
        %v584 = vadd.f32 %v578, %v582
        %v585 = vadd.f32 %v579, %v582
        %v586 = vld [vmem:[%s8] sm:$0xff]
        %v587 = vld [vmem:[%s8 + $0x8] sm:$0xff]
        %v588 = vld [vmem:[%s8 + $0x10] sm:$0xff]
        %v589 = vld [vmem:[%s8 + $0x18] sm:$0xff]
        %v590 = vld [vmem:[%s9] sm:$0x1]
        %v592 = vperm.slane %v590, 0
        %v595 = vsel %vm522, %v584, 0
        %v598 = vsel %vm522, %v585, 0
        %600 = vmatpush.msra.mxu0 0.0
        %601 = vmatpush.msra.mxu0 0.0
        %602 = vmatpush.msra.mxu0 0.0
        %603 = vmatpush.msra.mxu0 0.0
        %604 = vmatpush.msra.mxu0 0.0
        %605 = vmatpush.msra.mxu0 0.0
        %606 = vmatpush.msra.mxu0 0.0
        %607 = vmatpush.msra.mxu0 0.0
        %608 = vmatpush.msra.mxu0 0.0
        %609 = vmatpush.msra.mxu0 0.0
        %610 = vmatpush.msra.mxu0 0.0
        %611 = vmatpush.msra.mxu0 0.0
        %612 = vmatpush.msra.mxu0 %v589
        %613 = vmatpush.msra.mxu0 %v588
        %614 = vmatpush.msra.mxu0 %v587
        %615 = vmatpush.msra.mxu0 %v586
        %616 = vmatmul.f32.gmra.mxu0 %v595
        %v617 = vpop.f32.mrf.mxu0
        %v618 = vadd.f32 %v592, %v617
        %619 = vmatmul.f32.gmra.mxu0 %v598
        %v620 = vpop.f32.mrf.mxu0
        %v621 = vadd.f32 %v592, %v620
        %622 = vdwg.mxu0
        %vm623 = vcmask 523264
        %624 = vst.msk [vmem:[#allocation2] sm:$0xff] %vm623, %v618
        %625 = vst.msk [vmem:[#allocation2 + $0x8] sm:$0xff] %vm623, %v621
      $region72: #{tpu_custom_call.1} parent=67 // pred_fallthru
        _
      %v626 = vld [vmem:[%s456] sm:$0xff]
      %v627 = vld [vmem:[%s456 + $0x8] sm:$0xff]
      %v628 = vld [vmem:[%s456 + $0x10] sm:$0xff]
      %v629 = vld [vmem:[%s456 + $0x18] sm:$0xff]
      %v630 = vld [vmem:[%s456 + $0x20] sm:$0xff]
      %v631 = vld [vmem:[%s456 + $0x28] sm:$0xff]
      %v632 = vld [vmem:[%s456 + $0x30] sm:$0xff]
      %v633 = vld [vmem:[%s456 + $0x38] sm:$0xff]
      %v634 = vld [vmem:[%s6] sm:$0xff]
      %v635 = vld [vmem:[%s6 + $0x8] sm:$0xff]
      %v636 = vld [vmem:[%s6 + $0x10] sm:$0xff]
      %v637 = vld [vmem:[%s6 + $0x18] sm:$0xff]
      %v638 = vld [vmem:[%s7] sm:$0x1]
      %v640 = vperm.slane %v638, 0
      %vm642 = vcmask 261120
      %v644 = vsel %vm642, %v626, 0
      %v647 = vsel %vm642, %v627, 0
      %v650 = vsel %vm642, %v628, 0
      %v653 = vsel %vm642, %v629, 0
      %v656 = vsel %vm642, %v630, 0
      %v659 = vsel %vm642, %v631, 0
      %v662 = vsel %vm642, %v632, 0
      %v665 = vsel %vm642, %v633, 0
      %667 = vmatpush.msra.mxu0 0.0
      %668 = vmatpush.msra.mxu0 0.0
      %669 = vmatpush.msra.mxu0 0.0
      %670 = vmatpush.msra.mxu0 0.0
      %671 = vmatpush.msra.mxu0 0.0
      %672 = vmatpush.msra.mxu0 0.0
      %673 = vmatpush.msra.mxu0 0.0
      %674 = vmatpush.msra.mxu0 0.0
      %675 = vmatpush.msra.mxu0 0.0
      %676 = vmatpush.msra.mxu0 0.0
      %677 = vmatpush.msra.mxu0 0.0
      %678 = vmatpush.msra.mxu0 0.0
      %679 = vmatpush.msra.mxu0 %v637
      %680 = vmatpush.msra.mxu0 %v636
      %681 = vmatpush.msra.mxu0 %v635
      %682 = vmatpush.msra.mxu0 %v634
      %683 = vmatmul.f32.gmra.mxu0 %v644
      %v684 = vpop.f32.mrf.mxu0
      %v685 = vadd.f32 %v640, %v684
      %686 = vmatmul.f32.gmra.mxu0 %v647
      %v687 = vpop.f32.mrf.mxu0
      %v688 = vadd.f32 %v640, %v687
      %689 = vmatmul.f32.gmra.mxu0 %v650
      %v690 = vpop.f32.mrf.mxu0
      %v691 = vadd.f32 %v640, %v690
      %692 = vmatmul.f32.gmra.mxu0 %v653
      %v693 = vpop.f32.mrf.mxu0
      %v694 = vadd.f32 %v640, %v693
      %695 = vmatmul.f32.gmra.mxu0 %v656
      %v696 = vpop.f32.mrf.mxu0
      %v697 = vadd.f32 %v640, %v696
      %698 = vmatmul.f32.gmra.mxu0 %v659
      %v699 = vpop.f32.mrf.mxu0
      %v700 = vadd.f32 %v640, %v699
      %701 = vmatmul.f32.gmra.mxu0 %v662
      %v702 = vpop.f32.mrf.mxu0
      %v703 = vadd.f32 %v640, %v702
      %704 = vmatmul.f32.gmra.mxu0 %v665
      %v705 = vpop.f32.mrf.mxu0
      %v706 = vadd.f32 %v640, %v705
      %707 = vdwg.mxu0
      %v708 = vmul.f32 %v685, 0.35355338
      %v709 = vmul.f32 %v688, 0.35355338
      %v710 = vmul.f32 %v691, 0.35355338
      %v711 = vmul.f32 %v694, 0.35355338
      %v712 = vmul.f32 %v697, 0.35355338
      %v713 = vmul.f32 %v700, 0.35355338
      %v714 = vmul.f32 %v703, 0.35355338
      %v715 = vmul.f32 %v706, 0.35355338
      %v716 = vld [vmem:[#allocation2] sm:$0xff]
      %v717 = vld [vmem:[#allocation2 + $0x8] sm:$0xff]
      %vm718 = vcmask 64512
      %v720 = vsel %vm718, %v708, 0
      %v723 = vsel %vm718, %v709, 0
      %v726 = vsel %vm718, %v710, 0
      %v729 = vsel %vm718, %v711, 0
      %v732 = vsel %vm718, %v712, 0
      %v735 = vsel %vm718, %v713, 0
      %v738 = vsel %vm718, %v714, 0
      %v741 = vsel %vm718, %v715, 0
      %v744 = vsel %vm718, %v716, 0
      %v747 = vsel %vm718, %v717, 0
      %749 = vmatpush.xpose.msra.mxu0 0.0
      %750 = vmatpush.xpose.msra.mxu0 0.0
      %751 = vmatpush.xpose.msra.mxu0 0.0
      %752 = vmatpush.xpose.msra.mxu0 0.0
      %753 = vmatpush.xpose.msra.mxu0 0.0
      %754 = vmatpush.xpose.msra.mxu0 0.0
      %755 = vmatpush.xpose.msra.mxu0 0.0
      %756 = vmatpush.xpose.msra.mxu0 0.0
      %757 = vmatpush.xpose.msra.mxu0 0.0
      %758 = vmatpush.xpose.msra.mxu0 0.0
      %759 = vmatpush.xpose.msra.mxu0 0.0
      %760 = vmatpush.xpose.msra.mxu0 0.0
      %761 = vmatpush.xpose.msra.mxu0 0.0
      %762 = vmatpush.xpose.msra.mxu0 0.0
      %763 = vmatpush.xpose.msra.mxu0 %v747
      %764 = vmatpush.xpose.msra.mxu0 %v744
      %765 = vmatmul.f32.gmra.mxu0 %v720
      %v766 = vpop.f32.mrf.mxu0
      %v767 = vadd.f32 0.0, %v766
      %768 = vmatmul.f32.gmra.mxu0 %v723
      %v769 = vpop.f32.mrf.mxu0
      %v770 = vadd.f32 0.0, %v769
      %771 = vmatmul.f32.gmra.mxu0 %v726
      %v772 = vpop.f32.mrf.mxu0
      %v773 = vadd.f32 0.0, %v772
      %774 = vmatmul.f32.gmra.mxu0 %v729
      %v775 = vpop.f32.mrf.mxu0
      %v776 = vadd.f32 0.0, %v775
      %777 = vmatmul.f32.gmra.mxu0 %v732
      %v778 = vpop.f32.mrf.mxu0
      %v779 = vadd.f32 0.0, %v778
      %780 = vmatmul.f32.gmra.mxu0 %v735
      %v781 = vpop.f32.mrf.mxu0
      %v782 = vadd.f32 0.0, %v781
      %783 = vmatmul.f32.gmra.mxu0 %v738
      %v784 = vpop.f32.mrf.mxu0
      %v785 = vadd.f32 0.0, %v784
      %786 = vmatmul.f32.gmra.mxu0 %v741
      %v787 = vpop.f32.mrf.mxu0
      %v788 = vadd.f32 0.0, %v787
      %789 = vdwg.mxu0
      %vm790 = vcmask 130048
      %v791 = vsel %vm790, %v767, -inf
      %792 = vmax.xlane.f32.xlu0 %v791
      %v793 = vpop.xlane.xlu0 %792
      %v794 = vsel %vm790, %v770, -inf
      %795 = vmax.xlane.f32.xlu0 %v794
      %v796 = vpop.xlane.xlu0 %795
      %v797 = vsel %vm790, %v773, -inf
      %798 = vmax.xlane.f32.xlu0 %v797
      %v799 = vpop.xlane.xlu0 %798
      %v800 = vsel %vm790, %v776, -inf
      %801 = vmax.xlane.f32.xlu0 %v800
      %v802 = vpop.xlane.xlu0 %801
      %v803 = vsel %vm790, %v779, -inf
      %804 = vmax.xlane.f32.xlu0 %v803
      %v805 = vpop.xlane.xlu0 %804
      %v806 = vsel %vm790, %v782, -inf
      %807 = vmax.xlane.f32.xlu0 %v806
      %v808 = vpop.xlane.xlu0 %807
      %v809 = vsel %vm790, %v785, -inf
      %810 = vmax.xlane.f32.xlu0 %v809
      %v811 = vpop.xlane.xlu0 %810
      %v812 = vsel %vm790, %v788, -inf
      %813 = vmax.xlane.f32.xlu0 %v812
      %v814 = vpop.xlane.xlu0 %813
      %v815 = vsub.f32 %v767, %v793
      %v816 = vsub.f32 %v770, %v796
      %v817 = vsub.f32 %v773, %v799
      %v818 = vsub.f32 %v776, %v802
      %v819 = vsub.f32 %v779, %v805
      %v820 = vsub.f32 %v782, %v808
      %v821 = vsub.f32 %v785, %v811
      %v822 = vsub.f32 %v788, %v814
      %v823 = vmul.f32 %v815, 1.442695
      %v824 = vpow.pop %v823
      %v825 = vmul.f32 %v816, 1.442695
      %v826 = vpow.pop %v825
      %v827 = vmul.f32 %v817, 1.442695
      %v828 = vpow.pop %v827
      %v829 = vmul.f32 %v818, 1.442695
      %v830 = vpow.pop %v829
      %v831 = vmul.f32 %v819, 1.442695
      %v832 = vpow.pop %v831
      %v833 = vmul.f32 %v820, 1.442695
      %v834 = vpow.pop %v833
      %v835 = vmul.f32 %v821, 1.442695
      %v836 = vpow.pop %v835
      %v837 = vmul.f32 %v822, 1.442695
      %v838 = vpow.pop %v837
      %839 = vrot.lane.b32.xlu0 %v716, 96
      %v840 = vpop.permute.xlu0 %839
      %841 = vrot.lane.b32.xlu0 %v717, 96
      %v842 = vpop.permute.xlu0 %841
      %v846 = vsel %vm790, %v824, 0
      %v849 = vsel %vm790, %v826, 0
      %v852 = vsel %vm790, %v828, 0
      %v855 = vsel %vm790, %v830, 0
      %v858 = vsel %vm790, %v832, 0
      %v861 = vsel %vm790, %v834, 0
      %v864 = vsel %vm790, %v836, 0
      %v867 = vsel %vm790, %v838, 0
      %869 = vmatpush.msra.mxu0 0.0
      %870 = vmatpush.msra.mxu0 0.0
      %871 = vmatpush.msra.mxu0 0.0
      %872 = vmatpush.msra.mxu0 0.0
      %873 = vmatpush.msra.mxu0 0.0
      %874 = vmatpush.msra.mxu0 0.0
      %875 = vmatpush.msra.mxu0 0.0
      %876 = vmatpush.msra.mxu0 0.0
      %877 = vmatpush.msra.mxu0 0.0
      %878 = vmatpush.msra.mxu0 0.0
      %879 = vmatpush.msra.mxu0 0.0
      %880 = vmatpush.msra.mxu0 0.0
      %881 = vmatpush.msra.mxu0 0.0
      %882 = vmatpush.msra.mxu0 0.0
      %883 = vmatpush.msra.mxu0 %v842
      %884 = vmatpush.msra.mxu0 %v840
      %885 = vmatmul.f32.gmra.mxu0 %v846
      %v886 = vpop.f32.mrf.mxu0
      %v887 = vadd.f32 0.0, %v886
      %888 = vmatmul.f32.gmra.mxu0 %v849
      %v889 = vpop.f32.mrf.mxu0
      %v890 = vadd.f32 0.0, %v889
      %891 = vmatmul.f32.gmra.mxu0 %v852
      %v892 = vpop.f32.mrf.mxu0
      %v893 = vadd.f32 0.0, %v892
      %894 = vmatmul.f32.gmra.mxu0 %v855
      %v895 = vpop.f32.mrf.mxu0
      %v896 = vadd.f32 0.0, %v895
      %897 = vmatmul.f32.gmra.mxu0 %v858
      %v898 = vpop.f32.mrf.mxu0
      %v899 = vadd.f32 0.0, %v898
      %900 = vmatmul.f32.gmra.mxu0 %v861
      %v901 = vpop.f32.mrf.mxu0
      %v902 = vadd.f32 0.0, %v901
      %903 = vmatmul.f32.gmra.mxu0 %v864
      %v904 = vpop.f32.mrf.mxu0
      %v905 = vadd.f32 0.0, %v904
      %906 = vmatmul.f32.gmra.mxu0 %v867
      %v907 = vpop.f32.mrf.mxu0
      %v908 = vadd.f32 0.0, %v907
      %909 = vdwg.mxu0
      %v910 = vsel %vm790, %v824, 0.0
      %911 = vadd.xlane.f32.xlu0 %v910
      %v912 = vpop.xlane.xlu0 %911
      %v913 = vsel %vm790, %v826, 0.0
      %914 = vadd.xlane.f32.xlu0 %v913
      %v915 = vpop.xlane.xlu0 %914
      %v916 = vsel %vm790, %v828, 0.0
      %917 = vadd.xlane.f32.xlu0 %v916
      %v918 = vpop.xlane.xlu0 %917
      %v919 = vsel %vm790, %v830, 0.0
      %920 = vadd.xlane.f32.xlu0 %v919
      %v921 = vpop.xlane.xlu0 %920
      %v922 = vsel %vm790, %v832, 0.0
      %923 = vadd.xlane.f32.xlu0 %v922
      %v924 = vpop.xlane.xlu0 %923
      %v925 = vsel %vm790, %v834, 0.0
      %926 = vadd.xlane.f32.xlu0 %v925
      %v927 = vpop.xlane.xlu0 %926
      %v928 = vsel %vm790, %v836, 0.0
      %929 = vadd.xlane.f32.xlu0 %v928
      %v930 = vpop.xlane.xlu0 %929
      %v931 = vsel %vm790, %v838, 0.0
      %932 = vadd.xlane.f32.xlu0 %v931
      %v933 = vpop.xlane.xlu0 %932
      %v934 = vrcp.pop %v912
      %v935 = vrcp.pop %v915
      %v936 = vrcp.pop %v918
      %v937 = vrcp.pop %v921
      %v938 = vrcp.pop %v924
      %v939 = vrcp.pop %v927
      %v940 = vrcp.pop %v930
      %v941 = vrcp.pop %v933
      %v942 = vmul.f32 %v887, %v934
      %v943 = vmul.f32 %v890, %v935
      %v944 = vmul.f32 %v893, %v936
      %v945 = vmul.f32 %v896, %v937
      %v946 = vmul.f32 %v899, %v938
      %v947 = vmul.f32 %v902, %v939
      %v948 = vmul.f32 %v905, %v940
      %v949 = vmul.f32 %v908, %v941
      %950 = vrot.lane.b32.xlu0 %v708, 120
      %v951 = vpop.permute.xlu0 %950
      %952 = vrot.lane.b32.xlu0 %v709, 120
      %v953 = vpop.permute.xlu0 %952
      %954 = vrot.lane.b32.xlu0 %v710, 120
      %v955 = vpop.permute.xlu0 %954
      %956 = vrot.lane.b32.xlu0 %v711, 120
      %v957 = vpop.permute.xlu0 %956
      %958 = vrot.lane.b32.xlu0 %v712, 120
      %v959 = vpop.permute.xlu0 %958
      %960 = vrot.lane.b32.xlu0 %v713, 120
      %v961 = vpop.permute.xlu0 %960
      %962 = vrot.lane.b32.xlu0 %v714, 120
      %v963 = vpop.permute.xlu0 %962
      %964 = vrot.lane.b32.xlu0 %v715, 120
      %v965 = vpop.permute.xlu0 %964
      %966 = vrot.lane.b32.xlu0 %v716, 120
      %v967 = vpop.permute.xlu0 %966
      %968 = vrot.lane.b32.xlu0 %v717, 120
      %v969 = vpop.permute.xlu0 %968
      %v970 = vsel %vm718, %v951, 0
      %v972 = vsel %vm718, %v953, 0
      %v974 = vsel %vm718, %v955, 0
      %v976 = vsel %vm718, %v957, 0
      %v978 = vsel %vm718, %v959, 0
      %v980 = vsel %vm718, %v961, 0
      %v982 = vsel %vm718, %v963, 0
      %v984 = vsel %vm718, %v965, 0
      %v986 = vsel %vm718, %v967, 0
      %v988 = vsel %vm718, %v969, 0
      %990 = vmatpush.xpose.msra.mxu0 0.0
      %991 = vmatpush.xpose.msra.mxu0 0.0
      %992 = vmatpush.xpose.msra.mxu0 0.0
      %993 = vmatpush.xpose.msra.mxu0 0.0
      %994 = vmatpush.xpose.msra.mxu0 0.0
      %995 = vmatpush.xpose.msra.mxu0 0.0
      %996 = vmatpush.xpose.msra.mxu0 0.0
      %997 = vmatpush.xpose.msra.mxu0 0.0
      %998 = vmatpush.xpose.msra.mxu0 0.0
      %999 = vmatpush.xpose.msra.mxu0 0.0
      %1000 = vmatpush.xpose.msra.mxu0 0.0
      %1001 = vmatpush.xpose.msra.mxu0 0.0
      %1002 = vmatpush.xpose.msra.mxu0 0.0
      %1003 = vmatpush.xpose.msra.mxu0 0.0
      %1004 = vmatpush.xpose.msra.mxu0 %v988
      %1005 = vmatpush.xpose.msra.mxu0 %v986
      %1006 = vmatmul.f32.gmra.mxu0 %v970
      %v1007 = vpop.f32.mrf.mxu0
      %v1008 = vadd.f32 0.0, %v1007
      %1009 = vmatmul.f32.gmra.mxu0 %v972
      %v1010 = vpop.f32.mrf.mxu0
      %v1011 = vadd.f32 0.0, %v1010
      %1012 = vmatmul.f32.gmra.mxu0 %v974
      %v1013 = vpop.f32.mrf.mxu0
      %v1014 = vadd.f32 0.0, %v1013
      %1015 = vmatmul.f32.gmra.mxu0 %v976
      %v1016 = vpop.f32.mrf.mxu0
      %v1017 = vadd.f32 0.0, %v1016
      %1018 = vmatmul.f32.gmra.mxu0 %v978
      %v1019 = vpop.f32.mrf.mxu0
      %v1020 = vadd.f32 0.0, %v1019
      %1021 = vmatmul.f32.gmra.mxu0 %v980
      %v1022 = vpop.f32.mrf.mxu0
      %v1023 = vadd.f32 0.0, %v1022
      %1024 = vmatmul.f32.gmra.mxu0 %v982
      %v1025 = vpop.f32.mrf.mxu0
      %v1026 = vadd.f32 0.0, %v1025
      %1027 = vmatmul.f32.gmra.mxu0 %v984
      %v1028 = vpop.f32.mrf.mxu0
      %v1029 = vadd.f32 0.0, %v1028
      %1030 = vdwg.mxu0
      %v1031 = vsel %vm790, %v1008, -inf
      %1032 = vmax.xlane.f32.xlu0 %v1031
      %v1033 = vpop.xlane.xlu0 %1032
      %v1034 = vsel %vm790, %v1011, -inf
      %1035 = vmax.xlane.f32.xlu0 %v1034
      %v1036 = vpop.xlane.xlu0 %1035
      %v1037 = vsel %vm790, %v1014, -inf
      %1038 = vmax.xlane.f32.xlu0 %v1037
      %v1039 = vpop.xlane.xlu0 %1038
      %v1040 = vsel %vm790, %v1017, -inf
      %1041 = vmax.xlane.f32.xlu0 %v1040
      %v1042 = vpop.xlane.xlu0 %1041
      %v1043 = vsel %vm790, %v1020, -inf
      %1044 = vmax.xlane.f32.xlu0 %v1043
      %v1045 = vpop.xlane.xlu0 %1044
      %v1046 = vsel %vm790, %v1023, -inf
      %1047 = vmax.xlane.f32.xlu0 %v1046
      %v1048 = vpop.xlane.xlu0 %1047
      %v1049 = vsel %vm790, %v1026, -inf
      %1050 = vmax.xlane.f32.xlu0 %v1049
      %v1051 = vpop.xlane.xlu0 %1050
      %v1052 = vsel %vm790, %v1029, -inf
      %1053 = vmax.xlane.f32.xlu0 %v1052
      %v1054 = vpop.xlane.xlu0 %1053
      %v1055 = vsub.f32 %v1008, %v1033
      %v1056 = vsub.f32 %v1011, %v1036
      %v1057 = vsub.f32 %v1014, %v1039
      %v1058 = vsub.f32 %v1017, %v1042
      %v1059 = vsub.f32 %v1020, %v1045
      %v1060 = vsub.f32 %v1023, %v1048
      %v1061 = vsub.f32 %v1026, %v1051
      %v1062 = vsub.f32 %v1029, %v1054
      %v1063 = vmul.f32 %v1055, 1.442695
      %v1064 = vpow.pop %v1063
      %v1065 = vmul.f32 %v1056, 1.442695
      %v1066 = vpow.pop %v1065
      %v1067 = vmul.f32 %v1057, 1.442695
      %v1068 = vpow.pop %v1067
      %v1069 = vmul.f32 %v1058, 1.442695
      %v1070 = vpow.pop %v1069
      %v1071 = vmul.f32 %v1059, 1.442695
      %v1072 = vpow.pop %v1071
      %v1073 = vmul.f32 %v1060, 1.442695
      %v1074 = vpow.pop %v1073
      %v1075 = vmul.f32 %v1061, 1.442695
      %v1076 = vpow.pop %v1075
      %v1077 = vmul.f32 %v1062, 1.442695
      %v1078 = vpow.pop %v1077
      %1079 = vrot.lane.b32.xlu0 %v716, 88
      %v1080 = vpop.permute.xlu0 %1079
      %1081 = vrot.lane.b32.xlu0 %v717, 88
      %v1082 = vpop.permute.xlu0 %1081
      %v1086 = vsel %vm790, %v1064, 0
      %v1089 = vsel %vm790, %v1066, 0
      %v1092 = vsel %vm790, %v1068, 0
      %v1095 = vsel %vm790, %v1070, 0
      %v1098 = vsel %vm790, %v1072, 0
      %v1101 = vsel %vm790, %v1074, 0
      %v1104 = vsel %vm790, %v1076, 0
      %v1107 = vsel %vm790, %v1078, 0
      %1109 = vmatpush.msra.mxu0 0.0
      %1110 = vmatpush.msra.mxu0 0.0
      %1111 = vmatpush.msra.mxu0 0.0
      %1112 = vmatpush.msra.mxu0 0.0
      %1113 = vmatpush.msra.mxu0 0.0
      %1114 = vmatpush.msra.mxu0 0.0
      %1115 = vmatpush.msra.mxu0 0.0
      %1116 = vmatpush.msra.mxu0 0.0
      %1117 = vmatpush.msra.mxu0 0.0
      %1118 = vmatpush.msra.mxu0 0.0
      %1119 = vmatpush.msra.mxu0 0.0
      %1120 = vmatpush.msra.mxu0 0.0
      %1121 = vmatpush.msra.mxu0 0.0
      %1122 = vmatpush.msra.mxu0 0.0
      %1123 = vmatpush.msra.mxu0 %v1082
      %1124 = vmatpush.msra.mxu0 %v1080
      %1125 = vmatmul.f32.gmra.mxu0 %v1086
      %v1126 = vpop.f32.mrf.mxu0
      %v1127 = vadd.f32 0.0, %v1126
      %1128 = vmatmul.f32.gmra.mxu0 %v1089
      %v1129 = vpop.f32.mrf.mxu0
      %v1130 = vadd.f32 0.0, %v1129
      %1131 = vmatmul.f32.gmra.mxu0 %v1092
      %v1132 = vpop.f32.mrf.mxu0
      %v1133 = vadd.f32 0.0, %v1132
      %1134 = vmatmul.f32.gmra.mxu0 %v1095
      %v1135 = vpop.f32.mrf.mxu0
      %v1136 = vadd.f32 0.0, %v1135
      %1137 = vmatmul.f32.gmra.mxu0 %v1098
      %v1138 = vpop.f32.mrf.mxu0
      %v1139 = vadd.f32 0.0, %v1138
      %1140 = vmatmul.f32.gmra.mxu0 %v1101
      %v1141 = vpop.f32.mrf.mxu0
      %v1142 = vadd.f32 0.0, %v1141
      %1143 = vmatmul.f32.gmra.mxu0 %v1104
      %v1144 = vpop.f32.mrf.mxu0
      %v1145 = vadd.f32 0.0, %v1144
      %1146 = vmatmul.f32.gmra.mxu0 %v1107
      %v1147 = vpop.f32.mrf.mxu0
      %v1148 = vadd.f32 0.0, %v1147
      %1149 = vdwg.mxu0
      %v1150 = vsel %vm790, %v1064, 0.0
      %1151 = vadd.xlane.f32.xlu0 %v1150
      %v1152 = vpop.xlane.xlu0 %1151
      %v1153 = vsel %vm790, %v1066, 0.0
      %1154 = vadd.xlane.f32.xlu0 %v1153
      %v1155 = vpop.xlane.xlu0 %1154
      %v1156 = vsel %vm790, %v1068, 0.0
      %1157 = vadd.xlane.f32.xlu0 %v1156
      %v1158 = vpop.xlane.xlu0 %1157
      %v1159 = vsel %vm790, %v1070, 0.0
      %1160 = vadd.xlane.f32.xlu0 %v1159
      %v1161 = vpop.xlane.xlu0 %1160
      %v1162 = vsel %vm790, %v1072, 0.0
      %1163 = vadd.xlane.f32.xlu0 %v1162
      %v1164 = vpop.xlane.xlu0 %1163
      %v1165 = vsel %vm790, %v1074, 0.0
      %1166 = vadd.xlane.f32.xlu0 %v1165
      %v1167 = vpop.xlane.xlu0 %1166
      %v1168 = vsel %vm790, %v1076, 0.0
      %1169 = vadd.xlane.f32.xlu0 %v1168
      %v1170 = vpop.xlane.xlu0 %1169
      %v1171 = vsel %vm790, %v1078, 0.0
      %1172 = vadd.xlane.f32.xlu0 %v1171
      %v1173 = vpop.xlane.xlu0 %1172
      %v1174 = vrcp.pop %v1152
      %v1175 = vrcp.pop %v1155
      %v1176 = vrcp.pop %v1158
      %v1177 = vrcp.pop %v1161
      %v1178 = vrcp.pop %v1164
      %v1179 = vrcp.pop %v1167
      %v1180 = vrcp.pop %v1170
      %v1181 = vrcp.pop %v1173
      %v1182 = vmul.f32 %v1127, %v1174
      %v1183 = vmul.f32 %v1130, %v1175
      %v1184 = vmul.f32 %v1133, %v1176
      %v1185 = vmul.f32 %v1136, %v1177
      %v1186 = vmul.f32 %v1139, %v1178
      %v1187 = vmul.f32 %v1142, %v1179
      %v1188 = vmul.f32 %v1145, %v1180
      %v1189 = vmul.f32 %v1148, %v1181
      %1190 = vrot.lane.b32.xlu0 %v708, 112
      %v1191 = vpop.permute.xlu0 %1190
      %1192 = vrot.lane.b32.xlu0 %v709, 112
      %v1193 = vpop.permute.xlu0 %1192
      %1194 = vrot.lane.b32.xlu0 %v710, 112
      %v1195 = vpop.permute.xlu0 %1194
      %1196 = vrot.lane.b32.xlu0 %v711, 112
      %v1197 = vpop.permute.xlu0 %1196
      %1198 = vrot.lane.b32.xlu0 %v712, 112
      %v1199 = vpop.permute.xlu0 %1198
      %1200 = vrot.lane.b32.xlu0 %v713, 112
      %v1201 = vpop.permute.xlu0 %1200
      %1202 = vrot.lane.b32.xlu0 %v714, 112
      %v1203 = vpop.permute.xlu0 %1202
      %1204 = vrot.lane.b32.xlu0 %v715, 112
      %v1205 = vpop.permute.xlu0 %1204
      %1206 = vrot.lane.b32.xlu0 %v716, 112
      %v1207 = vpop.permute.xlu0 %1206
      %1208 = vrot.lane.b32.xlu0 %v717, 112
      %v1209 = vpop.permute.xlu0 %1208
      %v1210 = vsel %vm718, %v1191, 0
      %v1212 = vsel %vm718, %v1193, 0
      %v1214 = vsel %vm718, %v1195, 0
      %v1216 = vsel %vm718, %v1197, 0
      %v1218 = vsel %vm718, %v1199, 0
      %v1220 = vsel %vm718, %v1201, 0
      %v1222 = vsel %vm718, %v1203, 0
      %v1224 = vsel %vm718, %v1205, 0
      %v1226 = vsel %vm718, %v1207, 0
      %v1228 = vsel %vm718, %v1209, 0
      %1230 = vmatpush.xpose.msra.mxu0 0.0
      %1231 = vmatpush.xpose.msra.mxu0 0.0
      %1232 = vmatpush.xpose.msra.mxu0 0.0
      %1233 = vmatpush.xpose.msra.mxu0 0.0
      %1234 = vmatpush.xpose.msra.mxu0 0.0
      %1235 = vmatpush.xpose.msra.mxu0 0.0
      %1236 = vmatpush.xpose.msra.mxu0 0.0
      %1237 = vmatpush.xpose.msra.mxu0 0.0
      %1238 = vmatpush.xpose.msra.mxu0 0.0
      %1239 = vmatpush.xpose.msra.mxu0 0.0
      %1240 = vmatpush.xpose.msra.mxu0 0.0
      %1241 = vmatpush.xpose.msra.mxu0 0.0
      %1242 = vmatpush.xpose.msra.mxu0 0.0
      %1243 = vmatpush.xpose.msra.mxu0 0.0
      %1244 = vmatpush.xpose.msra.mxu0 %v1228
      %1245 = vmatpush.xpose.msra.mxu0 %v1226
      %1246 = vmatmul.f32.gmra.mxu0 %v1210
      %v1247 = vpop.f32.mrf.mxu0
      %v1248 = vadd.f32 0.0, %v1247
      %1249 = vmatmul.f32.gmra.mxu0 %v1212
      %v1250 = vpop.f32.mrf.mxu0
      %v1251 = vadd.f32 0.0, %v1250
      %1252 = vmatmul.f32.gmra.mxu0 %v1214
      %v1253 = vpop.f32.mrf.mxu0
      %v1254 = vadd.f32 0.0, %v1253
      %1255 = vmatmul.f32.gmra.mxu0 %v1216
      %v1256 = vpop.f32.mrf.mxu0
      %v1257 = vadd.f32 0.0, %v1256
      %1258 = vmatmul.f32.gmra.mxu0 %v1218
      %v1259 = vpop.f32.mrf.mxu0
      %v1260 = vadd.f32 0.0, %v1259
      %1261 = vmatmul.f32.gmra.mxu0 %v1220
      %v1262 = vpop.f32.mrf.mxu0
      %v1263 = vadd.f32 0.0, %v1262
      %1264 = vmatmul.f32.gmra.mxu0 %v1222
      %v1265 = vpop.f32.mrf.mxu0
      %v1266 = vadd.f32 0.0, %v1265
      %1267 = vmatmul.f32.gmra.mxu0 %v1224
      %v1268 = vpop.f32.mrf.mxu0
      %v1269 = vadd.f32 0.0, %v1268
      %1270 = vdwg.mxu0
      %v1271 = vsel %vm790, %v1248, -inf
      %1272 = vmax.xlane.f32.xlu0 %v1271
      %v1273 = vpop.xlane.xlu0 %1272
      %v1274 = vsel %vm790, %v1251, -inf
      %1275 = vmax.xlane.f32.xlu0 %v1274
      %v1276 = vpop.xlane.xlu0 %1275
      %v1277 = vsel %vm790, %v1254, -inf
      %1278 = vmax.xlane.f32.xlu0 %v1277
      %v1279 = vpop.xlane.xlu0 %1278
      %v1280 = vsel %vm790, %v1257, -inf
      %1281 = vmax.xlane.f32.xlu0 %v1280
      %v1282 = vpop.xlane.xlu0 %1281
      %v1283 = vsel %vm790, %v1260, -inf
      %1284 = vmax.xlane.f32.xlu0 %v1283
      %v1285 = vpop.xlane.xlu0 %1284
      %v1286 = vsel %vm790, %v1263, -inf
      %1287 = vmax.xlane.f32.xlu0 %v1286
      %v1288 = vpop.xlane.xlu0 %1287
      %v1289 = vsel %vm790, %v1266, -inf
      %1290 = vmax.xlane.f32.xlu0 %v1289
      %v1291 = vpop.xlane.xlu0 %1290
      %v1292 = vsel %vm790, %v1269, -inf
      %1293 = vmax.xlane.f32.xlu0 %v1292
      %v1294 = vpop.xlane.xlu0 %1293
      %v1295 = vsub.f32 %v1248, %v1273
      %v1296 = vsub.f32 %v1251, %v1276
      %v1297 = vsub.f32 %v1254, %v1279
      %v1298 = vsub.f32 %v1257, %v1282
      %v1299 = vsub.f32 %v1260, %v1285
      %v1300 = vsub.f32 %v1263, %v1288
      %v1301 = vsub.f32 %v1266, %v1291
      %v1302 = vsub.f32 %v1269, %v1294
      %v1303 = vmul.f32 %v1295, 1.442695
      %v1304 = vpow.pop %v1303
      %v1305 = vmul.f32 %v1296, 1.442695
      %v1306 = vpow.pop %v1305
      %v1307 = vmul.f32 %v1297, 1.442695
      %v1308 = vpow.pop %v1307
      %v1309 = vmul.f32 %v1298, 1.442695
      %v1310 = vpow.pop %v1309
      %v1311 = vmul.f32 %v1299, 1.442695
      %v1312 = vpow.pop %v1311
      %v1313 = vmul.f32 %v1300, 1.442695
      %v1314 = vpow.pop %v1313
      %v1315 = vmul.f32 %v1301, 1.442695
      %v1316 = vpow.pop %v1315
      %v1317 = vmul.f32 %v1302, 1.442695
      %v1318 = vpow.pop %v1317
      %1319 = vrot.lane.b32.xlu0 %v716, 80
      %v1320 = vpop.permute.xlu0 %1319
      %1321 = vrot.lane.b32.xlu0 %v717, 80
      %v1322 = vpop.permute.xlu0 %1321
      %v1326 = vsel %vm790, %v1304, 0
      %v1329 = vsel %vm790, %v1306, 0
      %v1332 = vsel %vm790, %v1308, 0
      %v1335 = vsel %vm790, %v1310, 0
      %v1338 = vsel %vm790, %v1312, 0
      %v1341 = vsel %vm790, %v1314, 0
      %v1344 = vsel %vm790, %v1316, 0
      %v1347 = vsel %vm790, %v1318, 0
      %1349 = vmatpush.msra.mxu0 0.0
      %1350 = vmatpush.msra.mxu0 0.0
      %1351 = vmatpush.msra.mxu0 0.0
      %1352 = vmatpush.msra.mxu0 0.0
      %1353 = vmatpush.msra.mxu0 0.0
      %1354 = vmatpush.msra.mxu0 0.0
      %1355 = vmatpush.msra.mxu0 0.0
      %1356 = vmatpush.msra.mxu0 0.0
      %1357 = vmatpush.msra.mxu0 0.0
      %1358 = vmatpush.msra.mxu0 0.0
      %1359 = vmatpush.msra.mxu0 0.0
      %1360 = vmatpush.msra.mxu0 0.0
      %1361 = vmatpush.msra.mxu0 0.0
      %1362 = vmatpush.msra.mxu0 0.0
      %1363 = vmatpush.msra.mxu0 %v1322
      %1364 = vmatpush.msra.mxu0 %v1320
      %1365 = vmatmul.f32.gmra.mxu0 %v1326
      %v1366 = vpop.f32.mrf.mxu0
      %v1367 = vadd.f32 0.0, %v1366
      %1368 = vmatmul.f32.gmra.mxu0 %v1329
      %v1369 = vpop.f32.mrf.mxu0
      %v1370 = vadd.f32 0.0, %v1369
      %1371 = vmatmul.f32.gmra.mxu0 %v1332
      %v1372 = vpop.f32.mrf.mxu0
      %v1373 = vadd.f32 0.0, %v1372
      %1374 = vmatmul.f32.gmra.mxu0 %v1335
      %v1375 = vpop.f32.mrf.mxu0
      %v1376 = vadd.f32 0.0, %v1375
      %1377 = vmatmul.f32.gmra.mxu0 %v1338
      %v1378 = vpop.f32.mrf.mxu0
      %v1379 = vadd.f32 0.0, %v1378
      %1380 = vmatmul.f32.gmra.mxu0 %v1341
      %v1381 = vpop.f32.mrf.mxu0
      %v1382 = vadd.f32 0.0, %v1381
      %1383 = vmatmul.f32.gmra.mxu0 %v1344
      %v1384 = vpop.f32.mrf.mxu0
      %v1385 = vadd.f32 0.0, %v1384
      %1386 = vmatmul.f32.gmra.mxu0 %v1347
      %v1387 = vpop.f32.mrf.mxu0
      %v1388 = vadd.f32 0.0, %v1387
      %1389 = vdwg.mxu0
      %v1390 = vsel %vm790, %v1304, 0.0
      %1391 = vadd.xlane.f32.xlu0 %v1390
      %v1392 = vpop.xlane.xlu0 %1391
      %v1393 = vsel %vm790, %v1306, 0.0
      %1394 = vadd.xlane.f32.xlu0 %v1393
      %v1395 = vpop.xlane.xlu0 %1394
      %v1396 = vsel %vm790, %v1308, 0.0
      %1397 = vadd.xlane.f32.xlu0 %v1396
      %v1398 = vpop.xlane.xlu0 %1397
      %v1399 = vsel %vm790, %v1310, 0.0
      %1400 = vadd.xlane.f32.xlu0 %v1399
      %v1401 = vpop.xlane.xlu0 %1400
      %v1402 = vsel %vm790, %v1312, 0.0
      %1403 = vadd.xlane.f32.xlu0 %v1402
      %v1404 = vpop.xlane.xlu0 %1403
      %v1405 = vsel %vm790, %v1314, 0.0
      %1406 = vadd.xlane.f32.xlu0 %v1405
      %v1407 = vpop.xlane.xlu0 %1406
      %v1408 = vsel %vm790, %v1316, 0.0
      %1409 = vadd.xlane.f32.xlu0 %v1408
      %v1410 = vpop.xlane.xlu0 %1409
      %v1411 = vsel %vm790, %v1318, 0.0
      %1412 = vadd.xlane.f32.xlu0 %v1411
      %v1413 = vpop.xlane.xlu0 %1412
      %v1414 = vrcp.pop %v1392
      %v1415 = vrcp.pop %v1395
      %v1416 = vrcp.pop %v1398
      %v1417 = vrcp.pop %v1401
      %v1418 = vrcp.pop %v1404
      %v1419 = vrcp.pop %v1407
      %v1420 = vrcp.pop %v1410
      %v1421 = vrcp.pop %v1413
      %v1422 = vmul.f32 %v1367, %v1414
      %v1423 = vmul.f32 %v1370, %v1415
      %v1424 = vmul.f32 %v1373, %v1416
      %v1425 = vmul.f32 %v1376, %v1417
      %v1426 = vmul.f32 %v1379, %v1418
      %v1427 = vmul.f32 %v1382, %v1419
      %v1428 = vmul.f32 %v1385, %v1420
      %v1429 = vmul.f32 %v1388, %v1421
      %1430 = vrot.lane.b32.xlu0 %v708, 104
      %v1431 = vpop.permute.xlu0 %1430
      %1432 = vrot.lane.b32.xlu0 %v709, 104
      %v1433 = vpop.permute.xlu0 %1432
      %1434 = vrot.lane.b32.xlu0 %v710, 104
      %v1435 = vpop.permute.xlu0 %1434
      %1436 = vrot.lane.b32.xlu0 %v711, 104
      %v1437 = vpop.permute.xlu0 %1436
      %1438 = vrot.lane.b32.xlu0 %v712, 104
      %v1439 = vpop.permute.xlu0 %1438
      %1440 = vrot.lane.b32.xlu0 %v713, 104
      %v1441 = vpop.permute.xlu0 %1440
      %1442 = vrot.lane.b32.xlu0 %v714, 104
      %v1443 = vpop.permute.xlu0 %1442
      %1444 = vrot.lane.b32.xlu0 %v715, 104
      %v1445 = vpop.permute.xlu0 %1444
      %1446 = vrot.lane.b32.xlu0 %v716, 104
      %v1447 = vpop.permute.xlu0 %1446
      %1448 = vrot.lane.b32.xlu0 %v717, 104
      %v1449 = vpop.permute.xlu0 %1448
      %v1450 = vsel %vm718, %v1431, 0
      %v1452 = vsel %vm718, %v1433, 0
      %v1454 = vsel %vm718, %v1435, 0
      %v1456 = vsel %vm718, %v1437, 0
      %v1458 = vsel %vm718, %v1439, 0
      %v1460 = vsel %vm718, %v1441, 0
      %v1462 = vsel %vm718, %v1443, 0
      %v1464 = vsel %vm718, %v1445, 0
      %v1466 = vsel %vm718, %v1447, 0
      %v1468 = vsel %vm718, %v1449, 0
      %1470 = vmatpush.xpose.msra.mxu0 0.0
      %1471 = vmatpush.xpose.msra.mxu0 0.0
      %1472 = vmatpush.xpose.msra.mxu0 0.0
      %1473 = vmatpush.xpose.msra.mxu0 0.0
      %1474 = vmatpush.xpose.msra.mxu0 0.0
      %1475 = vmatpush.xpose.msra.mxu0 0.0
      %1476 = vmatpush.xpose.msra.mxu0 0.0
      %1477 = vmatpush.xpose.msra.mxu0 0.0
      %1478 = vmatpush.xpose.msra.mxu0 0.0
      %1479 = vmatpush.xpose.msra.mxu0 0.0
      %1480 = vmatpush.xpose.msra.mxu0 0.0
      %1481 = vmatpush.xpose.msra.mxu0 0.0
      %1482 = vmatpush.xpose.msra.mxu0 0.0
      %1483 = vmatpush.xpose.msra.mxu0 0.0
      %1484 = vmatpush.xpose.msra.mxu0 %v1468
      %1485 = vmatpush.xpose.msra.mxu0 %v1466
      %1486 = vmatmul.f32.gmra.mxu0 %v1450
      %v1487 = vpop.f32.mrf.mxu0
      %v1488 = vadd.f32 0.0, %v1487
      %1489 = vmatmul.f32.gmra.mxu0 %v1452
      %v1490 = vpop.f32.mrf.mxu0
      %v1491 = vadd.f32 0.0, %v1490
      %1492 = vmatmul.f32.gmra.mxu0 %v1454
      %v1493 = vpop.f32.mrf.mxu0
      %v1494 = vadd.f32 0.0, %v1493
      %1495 = vmatmul.f32.gmra.mxu0 %v1456
      %v1496 = vpop.f32.mrf.mxu0
      %v1497 = vadd.f32 0.0, %v1496
      %1498 = vmatmul.f32.gmra.mxu0 %v1458
      %v1499 = vpop.f32.mrf.mxu0
      %v1500 = vadd.f32 0.0, %v1499
      %1501 = vmatmul.f32.gmra.mxu0 %v1460
      %v1502 = vpop.f32.mrf.mxu0
      %v1503 = vadd.f32 0.0, %v1502
      %1504 = vmatmul.f32.gmra.mxu0 %v1462
      %v1505 = vpop.f32.mrf.mxu0
      %v1506 = vadd.f32 0.0, %v1505
      %1507 = vmatmul.f32.gmra.mxu0 %v1464
      %v1508 = vpop.f32.mrf.mxu0
      %v1509 = vadd.f32 0.0, %v1508
      %1510 = vdwg.mxu0
      %v1511 = vsel %vm790, %v1488, -inf
      %1512 = vmax.xlane.f32.xlu0 %v1511
      %v1513 = vpop.xlane.xlu0 %1512
      %v1514 = vsel %vm790, %v1491, -inf
      %1515 = vmax.xlane.f32.xlu0 %v1514
      %v1516 = vpop.xlane.xlu0 %1515
      %v1517 = vsel %vm790, %v1494, -inf
      %1518 = vmax.xlane.f32.xlu0 %v1517
      %v1519 = vpop.xlane.xlu0 %1518
      %v1520 = vsel %vm790, %v1497, -inf
      %1521 = vmax.xlane.f32.xlu0 %v1520
      %v1522 = vpop.xlane.xlu0 %1521
      %v1523 = vsel %vm790, %v1500, -inf
      %1524 = vmax.xlane.f32.xlu0 %v1523
      %v1525 = vpop.xlane.xlu0 %1524
      %v1526 = vsel %vm790, %v1503, -inf
      %1527 = vmax.xlane.f32.xlu0 %v1526
      %v1528 = vpop.xlane.xlu0 %1527
      %v1529 = vsel %vm790, %v1506, -inf
      %1530 = vmax.xlane.f32.xlu0 %v1529
      %v1531 = vpop.xlane.xlu0 %1530
      %v1532 = vsel %vm790, %v1509, -inf
      %1533 = vmax.xlane.f32.xlu0 %v1532
      %v1534 = vpop.xlane.xlu0 %1533
      %v1535 = vsub.f32 %v1488, %v1513
      %v1536 = vsub.f32 %v1491, %v1516
      %v1537 = vsub.f32 %v1494, %v1519
      %v1538 = vsub.f32 %v1497, %v1522
      %v1539 = vsub.f32 %v1500, %v1525
      %v1540 = vsub.f32 %v1503, %v1528
      %v1541 = vsub.f32 %v1506, %v1531
      %v1542 = vsub.f32 %v1509, %v1534
      %v1543 = vmul.f32 %v1535, 1.442695
      %v1544 = vpow.pop %v1543
      %v1545 = vmul.f32 %v1536, 1.442695
      %v1546 = vpow.pop %v1545
      %v1547 = vmul.f32 %v1537, 1.442695
      %v1548 = vpow.pop %v1547
      %v1549 = vmul.f32 %v1538, 1.442695
      %v1550 = vpow.pop %v1549
      %v1551 = vmul.f32 %v1539, 1.442695
      %v1552 = vpow.pop %v1551
      %v1553 = vmul.f32 %v1540, 1.442695
      %v1554 = vpow.pop %v1553
      %v1555 = vmul.f32 %v1541, 1.442695
      %v1556 = vpow.pop %v1555
      %v1557 = vmul.f32 %v1542, 1.442695
      %v1558 = vpow.pop %v1557
      %1559 = vrot.lane.b32.xlu0 %v716, 72
      %v1560 = vpop.permute.xlu0 %1559
      %1561 = vrot.lane.b32.xlu0 %v717, 72
      %v1562 = vpop.permute.xlu0 %1561
      %v1566 = vsel %vm790, %v1544, 0
      %v1569 = vsel %vm790, %v1546, 0
      %v1572 = vsel %vm790, %v1548, 0
      %v1575 = vsel %vm790, %v1550, 0
      %v1578 = vsel %vm790, %v1552, 0
      %v1581 = vsel %vm790, %v1554, 0
      %v1584 = vsel %vm790, %v1556, 0
      %v1587 = vsel %vm790, %v1558, 0
      %1589 = vmatpush.msra.mxu0 0.0
      %1590 = vmatpush.msra.mxu0 0.0
      %1591 = vmatpush.msra.mxu0 0.0
      %1592 = vmatpush.msra.mxu0 0.0
      %1593 = vmatpush.msra.mxu0 0.0
      %1594 = vmatpush.msra.mxu0 0.0
      %1595 = vmatpush.msra.mxu0 0.0
      %1596 = vmatpush.msra.mxu0 0.0
      %1597 = vmatpush.msra.mxu0 0.0
      %1598 = vmatpush.msra.mxu0 0.0
      %1599 = vmatpush.msra.mxu0 0.0
      %1600 = vmatpush.msra.mxu0 0.0
      %1601 = vmatpush.msra.mxu0 0.0
      %1602 = vmatpush.msra.mxu0 0.0
      %1603 = vmatpush.msra.mxu0 %v1562
      %1604 = vmatpush.msra.mxu0 %v1560
      %1605 = vmatmul.f32.gmra.mxu0 %v1566
      %v1606 = vpop.f32.mrf.mxu0
      %v1607 = vadd.f32 0.0, %v1606
      %1608 = vmatmul.f32.gmra.mxu0 %v1569
      %v1609 = vpop.f32.mrf.mxu0
      %v1610 = vadd.f32 0.0, %v1609
      %1611 = vmatmul.f32.gmra.mxu0 %v1572
      %v1612 = vpop.f32.mrf.mxu0
      %v1613 = vadd.f32 0.0, %v1612
      %1614 = vmatmul.f32.gmra.mxu0 %v1575
      %v1615 = vpop.f32.mrf.mxu0
      %v1616 = vadd.f32 0.0, %v1615
      %1617 = vmatmul.f32.gmra.mxu0 %v1578
      %v1618 = vpop.f32.mrf.mxu0
      %v1619 = vadd.f32 0.0, %v1618
      %1620 = vmatmul.f32.gmra.mxu0 %v1581
      %v1621 = vpop.f32.mrf.mxu0
      %v1622 = vadd.f32 0.0, %v1621
      %1623 = vmatmul.f32.gmra.mxu0 %v1584
      %v1624 = vpop.f32.mrf.mxu0
      %v1625 = vadd.f32 0.0, %v1624
      %1626 = vmatmul.f32.gmra.mxu0 %v1587
      %v1627 = vpop.f32.mrf.mxu0
      %v1628 = vadd.f32 0.0, %v1627
      %1629 = vdwg.mxu0
      %v1630 = vsel %vm790, %v1544, 0.0
      %1631 = vadd.xlane.f32.xlu0 %v1630
      %v1632 = vpop.xlane.xlu0 %1631
      %v1633 = vsel %vm790, %v1546, 0.0
      %1634 = vadd.xlane.f32.xlu0 %v1633
      %v1635 = vpop.xlane.xlu0 %1634
      %v1636 = vsel %vm790, %v1548, 0.0
      %1637 = vadd.xlane.f32.xlu0 %v1636
      %v1638 = vpop.xlane.xlu0 %1637
      %v1639 = vsel %vm790, %v1550, 0.0
      %1640 = vadd.xlane.f32.xlu0 %v1639
      %v1641 = vpop.xlane.xlu0 %1640
      %v1642 = vsel %vm790, %v1552, 0.0
      %1643 = vadd.xlane.f32.xlu0 %v1642
      %v1644 = vpop.xlane.xlu0 %1643
      %v1645 = vsel %vm790, %v1554, 0.0
      %1646 = vadd.xlane.f32.xlu0 %v1645
      %v1647 = vpop.xlane.xlu0 %1646
      %v1648 = vsel %vm790, %v1556, 0.0
      %1649 = vadd.xlane.f32.xlu0 %v1648
      %v1650 = vpop.xlane.xlu0 %1649
      %v1651 = vsel %vm790, %v1558, 0.0
      %1652 = vadd.xlane.f32.xlu0 %v1651
      %v1653 = vpop.xlane.xlu0 %1652
      %v1654 = vrcp.pop %v1632
      %v1655 = vrcp.pop %v1635
      %v1656 = vrcp.pop %v1638
      %v1657 = vrcp.pop %v1641
      %v1658 = vrcp.pop %v1644
      %v1659 = vrcp.pop %v1647
      %v1660 = vrcp.pop %v1650
      %v1661 = vrcp.pop %v1653
      %v1662 = vmul.f32 %v1607, %v1654
      %v1663 = vmul.f32 %v1610, %v1655
      %v1664 = vmul.f32 %v1613, %v1656
      %v1665 = vmul.f32 %v1616, %v1657
      %v1666 = vmul.f32 %v1619, %v1658
      %v1667 = vmul.f32 %v1622, %v1659
      %v1668 = vmul.f32 %v1625, %v1660
      %v1669 = vmul.f32 %v1628, %v1661
      %1678 = vrot.lane.b32.xlu0 %v1182, 8
      %v1679 = vpop.permute.xlu0 %1678
      %1680 = vrot.lane.b32.xlu0 %v1183, 8
      %v1681 = vpop.permute.xlu0 %1680
      %1682 = vrot.lane.b32.xlu0 %v1184, 8
      %v1683 = vpop.permute.xlu0 %1682
      %1684 = vrot.lane.b32.xlu0 %v1185, 8
      %v1685 = vpop.permute.xlu0 %1684
      %1686 = vrot.lane.b32.xlu0 %v1186, 8
      %v1687 = vpop.permute.xlu0 %1686
      %1688 = vrot.lane.b32.xlu0 %v1187, 8
      %v1689 = vpop.permute.xlu0 %1688
      %1690 = vrot.lane.b32.xlu0 %v1188, 8
      %v1691 = vpop.permute.xlu0 %1690
      %1692 = vrot.lane.b32.xlu0 %v1189, 8
      %v1693 = vpop.permute.xlu0 %1692
      %1710 = vrot.lane.b32.xlu0 %v1422, 16
      %v1711 = vpop.permute.xlu0 %1710
      %1712 = vrot.lane.b32.xlu0 %v1423, 16
      %v1713 = vpop.permute.xlu0 %1712
      %1714 = vrot.lane.b32.xlu0 %v1424, 16
      %v1715 = vpop.permute.xlu0 %1714
      %1716 = vrot.lane.b32.xlu0 %v1425, 16
      %v1717 = vpop.permute.xlu0 %1716
      %1718 = vrot.lane.b32.xlu0 %v1426, 16
      %v1719 = vpop.permute.xlu0 %1718
      %1720 = vrot.lane.b32.xlu0 %v1427, 16
      %v1721 = vpop.permute.xlu0 %1720
      %1722 = vrot.lane.b32.xlu0 %v1428, 16
      %v1723 = vpop.permute.xlu0 %1722
      %1724 = vrot.lane.b32.xlu0 %v1429, 16
      %v1725 = vpop.permute.xlu0 %1724
      %1742 = vrot.lane.b32.xlu0 %v1662, 24
      %v1743 = vpop.permute.xlu0 %1742
      %1744 = vrot.lane.b32.xlu0 %v1663, 24
      %v1745 = vpop.permute.xlu0 %1744
      %1746 = vrot.lane.b32.xlu0 %v1664, 24
      %v1747 = vpop.permute.xlu0 %1746
      %1748 = vrot.lane.b32.xlu0 %v1665, 24
      %v1749 = vpop.permute.xlu0 %1748
      %1750 = vrot.lane.b32.xlu0 %v1666, 24
      %v1751 = vpop.permute.xlu0 %1750
      %1752 = vrot.lane.b32.xlu0 %v1667, 24
      %v1753 = vpop.permute.xlu0 %1752
      %1754 = vrot.lane.b32.xlu0 %v1668, 24
      %v1755 = vpop.permute.xlu0 %1754
      %1756 = vrot.lane.b32.xlu0 %v1669, 24
      %v1757 = vpop.permute.xlu0 %1756
      %v1766 = vsel %vm718, %v942, %v1679
      %v1767 = vsel %vm718, %v943, %v1681
      %v1768 = vsel %vm718, %v944, %v1683
      %v1769 = vsel %vm718, %v945, %v1685
      %v1770 = vsel %vm718, %v946, %v1687
      %v1771 = vsel %vm718, %v947, %v1689
      %v1772 = vsel %vm718, %v948, %v1691
      %v1773 = vsel %vm718, %v949, %v1693
      %v1774 = vsel %vm790, %v1766, %v1711
      %v1775 = vsel %vm790, %v1767, %v1713
      %v1776 = vsel %vm790, %v1768, %v1715
      %v1777 = vsel %vm790, %v1769, %v1717
      %v1778 = vsel %vm790, %v1770, %v1719
      %v1779 = vsel %vm790, %v1771, %v1721
      %v1780 = vsel %vm790, %v1772, %v1723
      %v1781 = vsel %vm790, %v1773, %v1725
      %vm1782 = vcmask 195584
      %v1783 = vsel %vm1782, %v1774, %v1743
      %v1784 = vsel %vm1782, %v1775, %v1745
      %v1785 = vsel %vm1782, %v1776, %v1747
      %v1786 = vsel %vm1782, %v1777, %v1749
      %v1787 = vsel %vm1782, %v1778, %v1751
      %v1788 = vsel %vm1782, %v1779, %v1753
      %v1789 = vsel %vm1782, %v1780, %v1755
      %v1790 = vsel %vm1782, %v1781, %v1757
      %v1791 = vld [vmem:[%s10] sm:$0xff]
      %v1792 = vld [vmem:[%s10 + $0x8] sm:$0xff]
      %v1793 = vld [vmem:[%s10 + $0x10] sm:$0xff]
      %v1794 = vld [vmem:[%s10 + $0x18] sm:$0xff]
      %v1795 = vld [vmem:[%s11] sm:$0x1]
      %v1797 = vperm.slane %v1795, 0
      %v1800 = vsel %vm642, %v1783, 0
      %v1803 = vsel %vm642, %v1784, 0
      %v1806 = vsel %vm642, %v1785, 0
      %v1809 = vsel %vm642, %v1786, 0
      %v1812 = vsel %vm642, %v1787, 0
      %v1815 = vsel %vm642, %v1788, 0
      %v1818 = vsel %vm642, %v1789, 0
      %v1821 = vsel %vm642, %v1790, 0
      %1823 = vmatpush.msra.mxu0 0.0
      %1824 = vmatpush.msra.mxu0 0.0
      %1825 = vmatpush.msra.mxu0 0.0
      %1826 = vmatpush.msra.mxu0 0.0
      %1827 = vmatpush.msra.mxu0 0.0
      %1828 = vmatpush.msra.mxu0 0.0
      %1829 = vmatpush.msra.mxu0 0.0
      %1830 = vmatpush.msra.mxu0 0.0
      %1831 = vmatpush.msra.mxu0 0.0
      %1832 = vmatpush.msra.mxu0 0.0
      %1833 = vmatpush.msra.mxu0 0.0
      %1834 = vmatpush.msra.mxu0 0.0
      %1835 = vmatpush.msra.mxu0 %v1794
      %1836 = vmatpush.msra.mxu0 %v1793
      %1837 = vmatpush.msra.mxu0 %v1792
      %1838 = vmatpush.msra.mxu0 %v1791
      %1839 = vmatmul.f32.gmra.mxu0 %v1800
      %v1840 = vpop.f32.mrf.mxu0
      %v1841 = vadd.f32 %v1797, %v1840
      %1842 = vmatmul.f32.gmra.mxu0 %v1803
      %v1843 = vpop.f32.mrf.mxu0
      %v1844 = vadd.f32 %v1797, %v1843
      %1845 = vmatmul.f32.gmra.mxu0 %v1806
      %v1846 = vpop.f32.mrf.mxu0
      %v1847 = vadd.f32 %v1797, %v1846
      %1848 = vmatmul.f32.gmra.mxu0 %v1809
      %v1849 = vpop.f32.mrf.mxu0
      %v1850 = vadd.f32 %v1797, %v1849
      %1851 = vmatmul.f32.gmra.mxu0 %v1812
      %v1852 = vpop.f32.mrf.mxu0
      %v1853 = vadd.f32 %v1797, %v1852
      %1854 = vmatmul.f32.gmra.mxu0 %v1815
      %v1855 = vpop.f32.mrf.mxu0
      %v1856 = vadd.f32 %v1797, %v1855
      %1857 = vmatmul.f32.gmra.mxu0 %v1818
      %v1858 = vpop.f32.mrf.mxu0
      %v1859 = vadd.f32 %v1797, %v1858
      %1860 = vmatmul.f32.gmra.mxu0 %v1821
      %v1861 = vpop.f32.mrf.mxu0
      %v1862 = vadd.f32 %v1797, %v1861
      %1863 = vdwg.mxu0
      %1864 = vst.msk [vmem:[%s471] sm:$0xff] %vm642, %v1841
      %1865 = vst.msk [vmem:[%s471 + $0x8] sm:$0xff] %vm642, %v1844
      %1866 = vst.msk [vmem:[%s471 + $0x10] sm:$0xff] %vm642, %v1847
      %1867 = vst.msk [vmem:[%s471 + $0x18] sm:$0xff] %vm642, %v1850
      %1868 = vst.msk [vmem:[%s471 + $0x20] sm:$0xff] %vm642, %v1853
      %1869 = vst.msk [vmem:[%s471 + $0x28] sm:$0xff] %vm642, %v1856
      %1870 = vst.msk [vmem:[%s471 + $0x30] sm:$0xff] %vm642, %v1859
      %1871 = vst.msk [vmem:[%s471 + $0x38] sm:$0xff] %vm642, %v1862
      %s1872 = smul.u32 8, %s28
      %p1873 = scmp.lt.s32.totalorder %s27, 1
      %s1874 = scalar_select %p1873, %s27, 1
      %p1875 = scmp.lt.s32.totalorder %s1872, 7
      %s1876 = scalar_select %p1875, %s1872, 7
      %s1877 = smul.addr %s1874, 8
      %s1878 = sadd.s32 %s1876, %s1877
      %s1879 = smul.addr %s1878, 8
      %s1880 = scalar_lea.vmem %s12, %s1879
      // Predicated region
      $region73: #{tpu_custom_call.1} parent=67 // pred_check
        %p1881 = pneg %p319
      $region74: #{tpu_custom_call.1} parent=67 // pred_check_branch
        %1883 = sbr.rel (%p1881) target = $region76
      $region75: #{tpu_custom_call.1} parent=67 // pred_region
        %s1884 = smul.u32 8, %s28
      $region76: #{tpu_custom_call.1} parent=67 // pred_fallthru
        _
    $region68: #{tpu_custom_call.1} parent=5 // pred_fallthru
      _
    %p1885 = scmp.le.s32.totalorder 2, %s18
    // Predicated region
    $region77: #{tpu_custom_call.1} parent=5 // pred_check
      %p1886 = pneg %p1885
    $region78: #{tpu_custom_call.1} parent=5 // pred_check_branch
      %1888 = sbr.rel (%p1886) target = $region80
    $region79: #{tpu_custom_call.1} parent=5 // pred_region
      %s1889 = ssub.s32 %s18, 2
      // Predicated region
      $region81: #{tpu_custom_call.1} parent=79 // pred_check
        %p1890 = pneg %p325
      $region82: #{tpu_custom_call.1} parent=79 // pred_check_branch
        %1892 = sbr.rel (%p1890) target = $region84
      $region83: #{tpu_custom_call.1} parent=79 // pred_region
        %s1893 = smul.u32 8, %s30
        %p1894 = scmp.lt.s32.totalorder %s29, 1
        %s1895 = scalar_select %p1894, %s29, 1
        %p1896 = scmp.lt.s32.totalorder %s1893, 7
        %s1897 = scalar_select %p1896, %s1893, 7
        %s1898 = smul.addr %s1895, 8
        %s1899 = sadd.s32 %s1897, %s1898
        %s1900 = smul.addr %s1899, 8
        %s1901 = scalar_lea.vmem %s12, %s1900
      $region84: #{tpu_custom_call.1} parent=79 // pred_fallthru
        _
    $region80: #{tpu_custom_call.1} parent=5 // pred_fallthru
      _
  $region6: #{tpu_custom_call.1} parent=0 // loop_footer
    %s22 = sadd.s32 1, %s18
  $region7: #{tpu_custom_call.1} parent=0 // loop_footer_branch
    %17 = sbr.rel target = $region3
  $region8: #{tpu_custom_call.1} parent=0 // loop_exit
    _

</llo_original>
